<compile_context>
chip_gen: v7x
topology: tpu7x:2x2x1
jax: 0.10.0
libtpu: 0.0.40
codegen_flags: <defaults>
</compile_context>

<pallas_src>
import jax
import jax.numpy as jnp
from jax.experimental import pallas as pl
from jax.experimental.pallas import tpu as pltpu


def _tactile_kernel(x_ref, k_ref, e_ref, t_ref, w_ref, b_ref, o_ref):
    """One (TB, :) batch tile.

    feat[b, d*K + j] = x[b, d] * k[b, j]   (x = [x1 | x2], concat in wrapper)
    is built lane-dense and fully 2-D via the precomputed 0/1 matrices
    E (D, DK) and T (K, DK) on the MXU (relayout-free expansion), then one
    dense (TB, DK) @ (DK, O_pad) MXU matmul + bias with f32 accumulation.
    """
    f32 = jnp.float32
    hi = jax.lax.Precision.HIGHEST

    x = x_ref[...]                        # (TB, D)  f32
    kk = k_ref[...]                       # (TB, K)  f32

    # x_exp[b, d*K + j] = x[b, d]   ;   k_til[b, d*K + j] = k[b, j]
    x_exp = jnp.dot(x, e_ref[...], preferred_element_type=f32, precision=hi)
    k_til = jnp.dot(kk, t_ref[...], preferred_element_type=f32, precision=hi)

    # Lane-dense 2-D outer product == torch (x ⊗ k).view(B, D*K); pure VPU.
    feat = x_exp * k_til                  # (TB, DK)

    w = w_ref[...]                        # (DK, O_pad), f32 or bf16
    if w.dtype == jnp.bfloat16:           # optional fast path (trace-time branch)
        out = jnp.dot(feat.astype(jnp.bfloat16), w, preferred_element_type=f32)
    else:
        out = jnp.dot(feat, w, preferred_element_type=f32, precision=hi)

    o_ref[...] = out + b_ref[...]         # lane-dense (TB, O_pad) store


def prepare_tactile_params(weight, bias, *, use_bf16_matmul=False, o_align=128):
    """One-time parameter prep (hoisted out of the per-call serving path).

    weight: (O, DK) torch nn.Linear layout; bias: (O,).
    Returns W^T padded to lane-dense O_pad (MXU-stationary RHS layout) + bias.
    """
    O, DK = weight.shape
    O_pad = pl.cdiv(O, o_align) * o_align     # lane-dense output stores
    w_p = jnp.pad(weight, ((0, O_pad - O), (0, 0))).T          # (DK, O_pad)
    w_p = w_p.astype(jnp.bfloat16 if use_bf16_matmul else jnp.float32)
    b_p = jnp.pad(bias, (0, O_pad - O)).reshape(1, O_pad).astype(jnp.float32)
    return {"w_p": w_p, "b_p": b_p, "out_features": O}


def _expansion_constants(D, K):
    """E[d, d*K + j] = 1 ('repeat x column K times'); T[j, d*K + j] = 1 ('tile k D times')."""
    DK = D * K
    m = jnp.arange(DK, dtype=jnp.int32)
    E = (m[None, :] // K == jnp.arange(D, dtype=jnp.int32)[:, None]).astype(jnp.float32)
    T = (m[None, :] % K == jnp.arange(K, dtype=jnp.int32)[:, None]).astype(jnp.float32)
    return E, T                                   # (D, DK), (K, DK)


def tactile_meas_forward(x1, x2, k, params, *, tile_b=256):
    """TactileMeasModel.forward with pre-prepared Linear params."""
    B, D1 = x1.shape
    D2 = x2.shape[1]
    K = k.shape[1]
    D = D1 + D2
    DK = D * K

    w_p, b_p, O = params["w_p"], params["b_p"], params["out_features"]
    assert w_p.shape[0] == DK, "Linear input_size must equal (D1 + D2) * K"
    O_pad = w_p.shape[1]

    # torch.cat folded into one wrapper concat: 2 input DMA streams, not 3.
    x = jnp.concatenate([x1, x2], axis=1).astype(jnp.float32)   # (B, D)
    k = k.astype(jnp.float32)

    # Adaptive batch tiling: small batches pad only to the f32 sublane (8);
    # large batches use tile_b-row tiles over a parallel grid.
    SUB = 8
    tb = max(SUB, pl.cdiv(B, SUB) * SUB) if B <= tile_b else tile_b
    B_pad = pl.cdiv(B, tb) * tb
    if B_pad != B:                                # zero rows contribute nothing
        pad = ((0, B_pad - B), (0, 0))
        x = jnp.pad(x, pad)
        k = jnp.pad(k, pad)

    E, T = _expansion_constants(D, K)             # hoisted constants, DMA'd once

    grid = (B_pad // tb,)
    wbytes = jnp.dtype(w_p.dtype).itemsize

    # Actual footprint: double-buffered per-step tiles + resident constants/W.
    vmem_bytes = (4 * (2 * tb * (D + K + O_pad) + 2 * ((D + K) * DK + O_pad))
                  + 2 * wbytes * DK * O_pad)
    vmem_limit = int(min(max(2 * vmem_bytes, 4 << 20), 64 << 20))

    cost = pl.CostEstimate(
        flops=2 * B_pad * DK * (O_pad + D + K),
        transcendentals=0,
        bytes_accessed=(4 * (B_pad * (D + K + O_pad) + (D + K) * DK + O_pad)
                        + wbytes * DK * O_pad),
    )

    out = pl.pallas_call(
        _tactile_kernel,
        out_shape=jax.ShapeDtypeStruct((B_pad, O_pad), jnp.float32),
        grid=grid,
        in_specs=[
            pl.BlockSpec((tb, D), lambda i: (i, 0)),        # x = [x1|x2] batch tile
            pl.BlockSpec((tb, K), lambda i: (i, 0)),        # k batch tile
            pl.BlockSpec((D, DK), lambda i: (0, 0)),        # E, VMEM-resident
            pl.BlockSpec((K, DK), lambda i: (0, 0)),        # T, VMEM-resident
            pl.BlockSpec((DK, O_pad), lambda i: (0, 0)),    # W^T, VMEM-resident
            pl.BlockSpec((1, O_pad), lambda i: (0, 0)),     # bias, VMEM-resident
        ],
        out_specs=pl.BlockSpec((tb, O_pad), lambda i: (i, 0)),
        compiler_params=pltpu.CompilerParams(
            # Independent batch tiles: pipeline DMA, shard across TCs on v7x.
            dimension_semantics=("parallel",),
            vmem_limit_bytes=vmem_limit,
        ),
        cost_estimate=cost,
    )(x, k, E, T, w_p, b_p)

    return out[:B, :O]


def tactile_meas_model(x1, x2, k, weight, bias, *, tile_b=256, use_bf16_matmul=False):
    """Convenience wrapper (prep + forward). Prefer caching prepare_tactile_params()."""
    params = prepare_tactile_params(weight, bias, use_bf16_matmul=use_bf16_matmul)
    return tactile_meas_forward(x1, x2, k, params, tile_b=tile_b)


if __name__ == "__main__":
    # Shapes implied by the forward pass:
    #   x1: (B, D1), x2: (B, D2), k: (B, K), nn.Linear((D1+D2)*K -> O)
    B, D1, D2, K, O = 2, 4, 4, 8, 32
    input_size = (D1 + D2) * K    # 64
    output_size = O

    key = jax.random.PRNGKey(0)
    k_x1, k_x2, k_k, k_w, k_b = jax.random.split(key, 5)

    x1 = jax.random.normal(k_x1, (B, D1), dtype=jnp.float32)
    x2 = jax.random.normal(k_x2, (B, D2), dtype=jnp.float32)
    kin = jax.random.normal(k_k, (B, K), dtype=jnp.float32)

    # Deterministic synthetic Linear parameters (torch layout: (O, input_size)).
    bound = 1.0 / (input_size ** 0.5)
    weight = jax.random.uniform(k_w, (output_size, input_size),
                                minval=-bound, maxval=bound, dtype=jnp.float32)
    bias = jax.random.uniform(k_b, (output_size,),
                              minval=-bound, maxval=bound, dtype=jnp.float32)

    # Parameter prep hoisted out of the serving path (done once).
    params = prepare_tactile_params(weight, bias, use_bf16_matmul=False)

    out = tactile_meas_forward(x1, x2, kin, params)
    out = jax.block_until_ready(out)

    # Pure-JAX reference (same math as the torch module).
    x = jnp.concatenate([x1, x2], axis=1)
    feat = (x[:, :, None] * kin[:, None, :]).reshape(B, -1)
    ref = feat @ weight.T + bias

    assert out.shape == (B, output_size)
    assert jnp.allclose(out, ref, atol=1e-4, rtol=1e-4)

    print("KERNEL_OK")
</pallas_src>

<mosaic_0001>
module attributes {stable_mosaic.version = 11 : i64} {
  func.func @_tactile_kernel(%arg0: i32, %arg1: memref<8x8xf32, #tpu.memory_space<vmem>>, %arg2: memref<8x8xf32, #tpu.memory_space<vmem>>, %arg3: memref<8x64xf32, #tpu.memory_space<vmem>>, %arg4: memref<8x64xf32, #tpu.memory_space<vmem>>, %arg5: memref<64x128xf32, #tpu.memory_space<vmem>>, %arg6: memref<1x128xf32, #tpu.memory_space<vmem>>, %arg7: memref<8x128xf32, #tpu.memory_space<vmem>>) attributes {dimension_semantics = [#tpu.dimension_semantics<parallel>], iteration_bounds = array<i64: 1>, scalar_prefetch = 0 : i64, scratch_operands = 0 : i64, tpu.core_type = #tpu.core_type<tc>, window_params = [{transform_indices = @transform_0, window_bounds = array<i64: 8, 8>}, {transform_indices = @transform_1, window_bounds = array<i64: 8, 8>}, {pipeline_mode = #tpu.pipeline_mode<synchronous>, transform_indices = @transform_2, window_bounds = array<i64: 8, 64>}, {pipeline_mode = #tpu.pipeline_mode<synchronous>, transform_indices = @transform_3, window_bounds = array<i64: 8, 64>}, {pipeline_mode = #tpu.pipeline_mode<synchronous>, transform_indices = @transform_4, window_bounds = array<i64: 64, 128>}, {pipeline_mode = #tpu.pipeline_mode<synchronous>, transform_indices = @transform_5, window_bounds = array<i64: 1, 128>}, {transform_indices = @transform_6, window_bounds = array<i64: 8, 128>}]} {
    %c0 = arith.constant 0 : index
    %c0_0 = arith.constant 0 : index
    %0 = vector.load %arg1[%c0, %c0_0] : memref<8x8xf32, #tpu.memory_space<vmem>>, vector<8x8xf32>
    %c0_1 = arith.constant 0 : index
    %c0_2 = arith.constant 0 : index
    %1 = vector.load %arg2[%c0_1, %c0_2] : memref<8x8xf32, #tpu.memory_space<vmem>>, vector<8x8xf32>
    %c0_3 = arith.constant 0 : index
    %c0_4 = arith.constant 0 : index
    %2 = vector.load %arg3[%c0_3, %c0_4] : memref<8x64xf32, #tpu.memory_space<vmem>>, vector<8x64xf32>
    %cst = arith.constant dense<0.000000e+00> : vector<8x64xf32>
    %3 = tpu.matmul %0, %2, %cst {dimension_numbers = #tpu.dot_dimension_numbers<[1], [0], [0], [1], [0, 0, 1, 1], [], []>, precision = #tpu.contract_precision<fp32>} : vector<8x8xf32>, vector<8x64xf32>, vector<8x64xf32> -> vector<8x64xf32>
    %c0_5 = arith.constant 0 : index
    %c0_6 = arith.constant 0 : index
    %4 = vector.load %arg4[%c0_5, %c0_6] : memref<8x64xf32, #tpu.memory_space<vmem>>, vector<8x64xf32>
    %cst_7 = arith.constant dense<0.000000e+00> : vector<8x64xf32>
    %5 = tpu.matmul %1, %4, %cst_7 {dimension_numbers = #tpu.dot_dimension_numbers<[1], [0], [0], [1], [0, 0, 1, 1], [], []>, precision = #tpu.contract_precision<fp32>} : vector<8x8xf32>, vector<8x64xf32>, vector<8x64xf32> -> vector<8x64xf32>
    %6 = arith.mulf %3, %5 : vector<8x64xf32>
    %c0_8 = arith.constant 0 : index
    %c0_9 = arith.constant 0 : index
    %7 = vector.load %arg5[%c0_8, %c0_9] : memref<64x128xf32, #tpu.memory_space<vmem>>, vector<64x128xf32>
    %cst_10 = arith.constant dense<0.000000e+00> : vector<8x128xf32>
    %8 = tpu.matmul %6, %7, %cst_10 {dimension_numbers = #tpu.dot_dimension_numbers<[1], [0], [0], [1], [0, 0, 1, 1], [], []>, precision = #tpu.contract_precision<fp32>} : vector<8x64xf32>, vector<64x128xf32>, vector<8x128xf32> -> vector<8x128xf32>
    %c0_11 = arith.constant 0 : index
    %c0_12 = arith.constant 0 : index
    %9 = vector.load %arg6[%c0_11, %c0_12] : memref<1x128xf32, #tpu.memory_space<vmem>>, vector<1x128xf32>
    %10 = vector.broadcast %9 : vector<1x128xf32> to vector<8x128xf32>
    %11 = arith.addf %8, %10 : vector<8x128xf32>
    %c0_13 = arith.constant 0 : index
    %c0_14 = arith.constant 0 : index
    %12 = vector.load %arg7[%c0_13, %c0_14] : memref<8x128xf32, #tpu.memory_space<vmem>>, vector<8x128xf32>
    tpu.vector_store %arg7[%c0_13, %c0_14], %11 {strides = array<i32>} : memref<8x128xf32, #tpu.memory_space<vmem>>, vector<8x128xf32>,
    return
  }
  func.func @transform_0(%arg0: i32) -> (i32, i32) {
    %c0_i32 = arith.constant 0 : i32
    %c0_i32_0 = arith.constant 0 : i32
    return %arg0, %c0_i32 : i32, i32
  }
  func.func @transform_1(%arg0: i32) -> (i32, i32) {
    %c0_i32 = arith.constant 0 : i32
    %c0_i32_0 = arith.constant 0 : i32
    return %arg0, %c0_i32 : i32, i32
  }
  func.func @transform_2(%arg0: i32) -> (i32, i32) {
    %c0_i32 = arith.constant 0 : i32
    %c0_i32_0 = arith.constant 0 : i32
    %c0_i32_1 = arith.constant 0 : i32
    return %c0_i32, %c0_i32_0 : i32, i32
  }
  func.func @transform_3(%arg0: i32) -> (i32, i32) {
    %c0_i32 = arith.constant 0 : i32
    %c0_i32_0 = arith.constant 0 : i32
    %c0_i32_1 = arith.constant 0 : i32
    return %c0_i32, %c0_i32_0 : i32, i32
  }
  func.func @transform_4(%arg0: i32) -> (i32, i32) {
    %c0_i32 = arith.constant 0 : i32
    %c0_i32_0 = arith.constant 0 : i32
    %c0_i32_1 = arith.constant 0 : i32
    return %c0_i32, %c0_i32_0 : i32, i32
  }
  func.func @transform_5(%arg0: i32) -> (i32, i32) {
    %c0_i32 = arith.constant 0 : i32
    %c0_i32_0 = arith.constant 0 : i32
    %c0_i32_1 = arith.constant 0 : i32
    return %c0_i32, %c0_i32_0 : i32, i32
  }
  func.func @transform_6(%arg0: i32) -> (i32, i32) {
    %c0_i32 = arith.constant 0 : i32
    %c0_i32_0 = arith.constant 0 : i32
    return %arg0, %c0_i32 : i32, i32
  }
}

</mosaic_0001>

<llo_original>
// kernel: tpu_custom_call.1
$region0: #{tpu_custom_call.1}
  #allocation0 [shape = 'u32[]', space=smem, size = 0x4, offset = 0x4, fixed_abs, tag = 'smem constant byte address 0x4 - core index']
  #allocation1 [shape = 'u32[144,128]{1,0:T(1,128)}', space=vmem, size = 0x12000, scoped, tag = 'internal scratch']
  %s0 = inlined_call_operand.hbm [shape: f32[8,8], index: 0, kind: input, shape index: {}]
  %s1 = inlined_call_operand.hbm [shape: f32[8,8], index: 1, kind: input, shape index: {}]
  %s2 = inlined_call_operand.hbm [shape: f32[8,64], index: 2, kind: input, shape index: {}]
  %s3 = inlined_call_operand.vmem [shape: f32[8,64], index: 3, kind: input, shape index: {}]
  %s4 = inlined_call_operand.hbm [shape: f32[64,128], index: 4, kind: input, shape index: {}]
  %s5 = inlined_call_operand.vmem [shape: f32[1,128], index: 5, kind: input, shape index: {}]
  %s6 = inlined_call_operand.hbm [shape: f32[8,128], index: 6, kind: output, shape index: {}]
  %s7 = sld [smem:[#allocation0]]
  $region50: #{tpu_custom_call.1} parent=0
    _
  %s9 = ssub.s32 1, %s7
  %s10 = scalar_select 0, %s9, %s7
  $region1: #{tpu_custom_call.1} parent=0
    #allocation2 [shape = 'u8[4096]{0}', space=vmem, size = 0x1000, scoped, tag = 'input window, operand 0, single buffered']
    #allocation3 [shape = 's32[1]{0}', space=sflag, size = 0x4, scoped, tag = 'scoped memory for tpu_custom_call.1']
    #allocation4 [shape = 's32[1]{0}', space=sflag, size = 0x4, scoped, tag = 'scoped memory for tpu_custom_call.1']
    #allocation5 [shape = 'u8[4096]{0}', space=vmem, size = 0x1000, scoped, tag = 'input window, operand 1, single buffered']
    #allocation6 [shape = 's32[1]{0}', space=sflag, size = 0x4, scoped, tag = 'scoped memory for tpu_custom_call.1']
    #allocation7 [shape = 'u8[4096]{0}', space=vmem, size = 0x1000, scoped, tag = 'input window, operand 2, single buffered']
    #allocation8 [shape = 'u8[32768]{0}', space=vmem, size = 0x8000, scoped, tag = 'input window, operand 4, single buffered']
    #allocation9 [shape = 's32[1]{0}', space=sflag, size = 0x4, scoped, tag = 'scoped memory for tpu_custom_call.1']
    #allocation10 [shape = 'u8[4096]{0}', space=vmem, size = 0x1000, scoped, tag = 'output window, operand 0, single buffered']
    %11 = vsyncpa [#allocation3], 0
    %12 = vsyncpa [#allocation6], 0
    %13 = vsyncpa [#allocation9], 0
    %14 = vsyncpa [#allocation4], 0
    // Predicated region
    $region2: #{tpu_custom_call.1} parent=1 // pred_check
      _
    $region3: #{tpu_custom_call.1} parent=1 // pred_check_branch
      %16 = sbr.rel (0) target = $region5
    $region4: #{tpu_custom_call.1} parent=1 // pred_region
      %s18 = ssub.s32 128, 128
      %19 = vsyncadd [#allocation3], %s18
      %s21 = sshll.u32 [#allocation2], 4
      %s22 = int_to_ptr.vmem [resolvable:$true] %s21
      %24 = dma.hbm_to_vmem [thread:$0]  %s0, 128, %s22, [#allocation3]
    $region5: #{tpu_custom_call.1} parent=1 // pred_fallthru
      _
    // Predicated region
    $region6: #{tpu_custom_call.1} parent=1 // pred_check
      _
    $region7: #{tpu_custom_call.1} parent=1 // pred_check_branch
      %26 = sbr.rel (0) target = $region9
    $region8: #{tpu_custom_call.1} parent=1 // pred_region
      %s28 = ssub.s32 128, 128
      %29 = vsyncadd [#allocation6], %s28
      %s31 = sshll.u32 [#allocation5], 4
      %s32 = int_to_ptr.vmem [resolvable:$true] %s31
      %34 = dma.hbm_to_vmem [thread:$0]  %s1, 128, %s32, [#allocation6]
    $region9: #{tpu_custom_call.1} parent=1 // pred_fallthru
      _
    // Predicated region
    $region10: #{tpu_custom_call.1} parent=1 // pred_check
      _
    $region11: #{tpu_custom_call.1} parent=1 // pred_check_branch
      %36 = sbr.rel (0) target = $region13
    $region12: #{tpu_custom_call.1} parent=1 // pred_region
      %s38 = ssub.s32 128, 128
      %39 = vsyncadd [#allocation6], %s38
      %s41 = sshll.u32 [#allocation7], 4
      %s42 = int_to_ptr.vmem [resolvable:$true] %s41
      %44 = dma.hbm_to_vmem [thread:$0]  %s2, 128, %s42, [#allocation6]
    $region13: #{tpu_custom_call.1} parent=1 // pred_fallthru
      _
    // Predicated region
    $region14: #{tpu_custom_call.1} parent=1 // pred_check
      _
    $region15: #{tpu_custom_call.1} parent=1 // pred_check_branch
      %46 = sbr.rel (0) target = $region17
    $region16: #{tpu_custom_call.1} parent=1 // pred_region
      _
    $region17: #{tpu_custom_call.1} parent=1 // pred_fallthru
      _
    // Predicated region
    $region18: #{tpu_custom_call.1} parent=1 // pred_check
      _
    $region19: #{tpu_custom_call.1} parent=1 // pred_check_branch
      %48 = sbr.rel (0) target = $region21
    $region20: #{tpu_custom_call.1} parent=1 // pred_region
      %s50 = ssub.s32 1024, 1024
      %51 = vsyncadd [#allocation9], %s50
      %s52 = sshll.u32 [#allocation8], 4
      %s53 = int_to_ptr.vmem [resolvable:$true] %s52
      %58 = dma.hbm_to_vmem [thread:$0]  %s4, 1024, %s53, [#allocation9], 128, 128, 8
    $region21: #{tpu_custom_call.1} parent=1 // pred_fallthru
      _
    // Predicated region
    $region22: #{tpu_custom_call.1} parent=1 // pred_check
      _
    $region23: #{tpu_custom_call.1} parent=1 // pred_check_branch
      %60 = sbr.rel (0) target = $region25
    $region24: #{tpu_custom_call.1} parent=1 // pred_region
      _
    $region25: #{tpu_custom_call.1} parent=1 // pred_fallthru
      _
    // Predicated region
    $region26: #{tpu_custom_call.1} parent=1 // pred_check
      _
    $region27: #{tpu_custom_call.1} parent=1 // pred_check_branch
      %62 = sbr.rel (0) target = $region29
    $region28: #{tpu_custom_call.1} parent=1 // pred_region
      %63 = dma.done [#allocation3], 128
    $region29: #{tpu_custom_call.1} parent=1 // pred_fallthru
      _
    // Predicated region
    $region30: #{tpu_custom_call.1} parent=1 // pred_check
      _
    $region31: #{tpu_custom_call.1} parent=1 // pred_check_branch
      %65 = sbr.rel (0) target = $region33
    $region32: #{tpu_custom_call.1} parent=1 // pred_region
      %66 = dma.done [#allocation6], 128
    $region33: #{tpu_custom_call.1} parent=1 // pred_fallthru
      _
    // Predicated region
    $region34: #{tpu_custom_call.1} parent=1 // pred_check
      _
    $region35: #{tpu_custom_call.1} parent=1 // pred_check_branch
      %68 = sbr.rel (0) target = $region37
    $region36: #{tpu_custom_call.1} parent=1 // pred_region
      %69 = dma.done [#allocation6], 128
    $region37: #{tpu_custom_call.1} parent=1 // pred_fallthru
      _
    // Predicated region
    $region38: #{tpu_custom_call.1} parent=1 // pred_check
      _
    $region39: #{tpu_custom_call.1} parent=1 // pred_check_branch
      %71 = sbr.rel (0) target = $region41
    $region40: #{tpu_custom_call.1} parent=1 // pred_region
      %72 = dma.done [#allocation9], 1024
    $region41: #{tpu_custom_call.1} parent=1 // pred_fallthru
      _
    %v73 = vld [vmem:[#allocation2] sm:$0xff]
    %v74 = vld [vmem:[#allocation5] sm:$0xff]
    %v75 = vld [vmem:[#allocation7] sm:$0xff]
    %vm76 = vcmask 64512
    %v78 = vsel %vm76, %v73, 0
    %80 = vmatprep.subr.mxu0 0.0
    %v81 = vand.u32 %v75, 4294901760
    %82 = vmatpush1.msra.mxu0 %v81
    %83 = vmatprep.subr.mxu0 0.0
    %84 = vmatpush1.msra.mxu0 0.0
    %85 = vmatprep.subr.mxu0 0.0
    %86 = vmatpush1.msra.mxu0 0.0
    %87 = vmatprep.subr.mxu0 0.0
    %88 = vmatpush1.msra.mxu0 0.0
    %89 = vmatprep.subr.mxu0 0.0
    %90 = vmatpush1.msra.mxu0 0.0
    %91 = vmatprep.subr.mxu0 0.0
    %92 = vmatpush1.msra.mxu0 0.0
    %93 = vmatprep.subr.mxu0 0.0
    %94 = vmatpush1.msra.mxu0 0.0
    %95 = vmatprep.subr.mxu0 0.0
    %96 = vmatpush1.msra.mxu0 0.0
    %97 = vmatprep.subr.mxu0 0.0
    %98 = vmatpush1.msra.mxu0 0.0
    %99 = vmatprep.subr.mxu0 0.0
    %100 = vmatpush1.msra.mxu0 0.0
    %101 = vmatprep.subr.mxu0 0.0
    %102 = vmatpush1.msra.mxu0 0.0
    %103 = vmatprep.subr.mxu0 0.0
    %104 = vmatpush1.msra.mxu0 0.0
    %105 = vmatprep.subr.mxu0 0.0
    %106 = vmatpush1.msra.mxu0 0.0
    %107 = vmatprep.subr.mxu0 0.0
    %108 = vmatpush1.msra.mxu0 0.0
    %109 = vmatprep.subr.mxu0 0.0
    %110 = vmatpush1.msra.mxu0 0.0
    %111 = vmatprep.subr.mxu0 0.0
    %112 = vmatpush1.msra.mxu0 0.0
    %113 = vmatprep.subr.mxu0 0.0
    %114 = vmatpush1.msra.mxu0 0.0
    %115 = vmatprep.subr.mxu0 0.0
    %116 = vmatpush1.msra.mxu0 0.0
    %117 = vmatprep.subr.mxu0 0.0
    %118 = vmatpush1.msra.mxu0 0.0
    %119 = vmatprep.subr.mxu0 0.0
    %120 = vmatpush1.msra.mxu0 0.0
    %121 = vmatprep.subr.mxu0 0.0
    %122 = vmatpush1.msra.mxu0 0.0
    %123 = vmatprep.subr.mxu0 0.0
    %124 = vmatpush1.msra.mxu0 0.0
    %125 = vmatprep.subr.mxu0 0.0
    %126 = vmatpush1.msra.mxu0 0.0
    %127 = vmatprep.subr.mxu0 0.0
    %128 = vmatpush1.msra.mxu0 0.0
    %129 = vmatprep.subr.mxu0 0.0
    %130 = vmatpush1.msra.mxu0 0.0
    %131 = vmatprep.subr.mxu0 0.0
    %132 = vmatpush1.msra.mxu0 0.0
    %133 = vmatprep.subr.mxu0 0.0
    %134 = vmatpush1.msra.mxu0 0.0
    %135 = vmatprep.subr.mxu0 0.0
    %136 = vmatpush1.msra.mxu0 0.0
    %137 = vmatprep.subr.mxu0 0.0
    %138 = vmatpush1.msra.mxu0 0.0
    %139 = vmatprep.subr.mxu0 0.0
    %140 = vmatpush1.msra.mxu0 0.0
    %141 = vmatprep.subr.mxu0 0.0
    %142 = vmatpush1.msra.mxu0 0.0
    %143 = vmatprep.subr.mxu0 0.0
    %144 = vmatpush1.msra.mxu0 0.0
    %145 = vmatprep.mubr.f32.mxu0 0.0
    %v146 = vand.u32 %v78, 4294901760
    %v147 = vsub.f32 %v78, %v146
    %v148 = vand.u32 %v147, 4294901760
    %v149 = vsub.f32 %v147, %v148
    %v150 = vand.u32 %v149, 4294901760
    %151 = vmatmul.mubr.f32.gmra.mrb[0].mxu0 %v150
    %v152 = vpop.f32.mrb[0].mxu0
    %v153 = vadd.f32 0.0, %v152
    %v154 = vpop.f32.mrb[0].mxu0
    %155 = vdwg.mxu0
    %156 = vmatprep.subr.mxu0 0.0
    %v157 = vand.u32 %v75, 4294901760
    %v158 = vsub.f32 %v75, %v157
    %v159 = vand.u32 %v158, 4294901760
    %v160 = vsub.f32 %v158, %v159
    %v161 = vand.u32 %v160, 4294901760
    %162 = vmatpush1.msra.mxu0 %v161
    %163 = vmatprep.subr.mxu0 0.0
    %164 = vmatpush1.msra.mxu0 0.0
    %165 = vmatprep.subr.mxu0 0.0
    %166 = vmatpush1.msra.mxu0 0.0
    %167 = vmatprep.subr.mxu0 0.0
    %168 = vmatpush1.msra.mxu0 0.0
    %169 = vmatprep.subr.mxu0 0.0
    %170 = vmatpush1.msra.mxu0 0.0
    %171 = vmatprep.subr.mxu0 0.0
    %172 = vmatpush1.msra.mxu0 0.0
    %173 = vmatprep.subr.mxu0 0.0
    %174 = vmatpush1.msra.mxu0 0.0
    %175 = vmatprep.subr.mxu0 0.0
    %176 = vmatpush1.msra.mxu0 0.0
    %177 = vmatprep.subr.mxu0 0.0
    %178 = vmatpush1.msra.mxu0 0.0
    %179 = vmatprep.subr.mxu0 0.0
    %180 = vmatpush1.msra.mxu0 0.0
    %181 = vmatprep.subr.mxu0 0.0
    %182 = vmatpush1.msra.mxu0 0.0
    %183 = vmatprep.subr.mxu0 0.0
    %184 = vmatpush1.msra.mxu0 0.0
    %185 = vmatprep.subr.mxu0 0.0
    %186 = vmatpush1.msra.mxu0 0.0
    %187 = vmatprep.subr.mxu0 0.0
    %188 = vmatpush1.msra.mxu0 0.0
    %189 = vmatprep.subr.mxu0 0.0
    %190 = vmatpush1.msra.mxu0 0.0
    %191 = vmatprep.subr.mxu0 0.0
    %192 = vmatpush1.msra.mxu0 0.0
    %193 = vmatprep.subr.mxu0 0.0
    %194 = vmatpush1.msra.mxu0 0.0
    %195 = vmatprep.subr.mxu0 0.0
    %196 = vmatpush1.msra.mxu0 0.0
    %197 = vmatprep.subr.mxu0 0.0
    %198 = vmatpush1.msra.mxu0 0.0
    %199 = vmatprep.subr.mxu0 0.0
    %200 = vmatpush1.msra.mxu0 0.0
    %201 = vmatprep.subr.mxu0 0.0
    %202 = vmatpush1.msra.mxu0 0.0
    %203 = vmatprep.subr.mxu0 0.0
    %204 = vmatpush1.msra.mxu0 0.0
    %205 = vmatprep.subr.mxu0 0.0
    %206 = vmatpush1.msra.mxu0 0.0
    %207 = vmatprep.subr.mxu0 0.0
    %208 = vmatpush1.msra.mxu0 0.0
    %209 = vmatprep.subr.mxu0 0.0
    %210 = vmatpush1.msra.mxu0 0.0
    %211 = vmatprep.subr.mxu0 0.0
    %212 = vmatpush1.msra.mxu0 0.0
    %213 = vmatprep.subr.mxu0 0.0
    %214 = vmatpush1.msra.mxu0 0.0
    %215 = vmatprep.subr.mxu0 0.0
    %216 = vmatpush1.msra.mxu0 0.0
    %217 = vmatprep.subr.mxu0 0.0
    %218 = vmatpush1.msra.mxu0 0.0
    %219 = vmatprep.subr.mxu0 0.0
    %220 = vmatpush1.msra.mxu0 0.0
    %221 = vmatprep.subr.mxu0 0.0
    %222 = vmatpush1.msra.mxu0 0.0
    %223 = vmatprep.subr.mxu0 0.0
    %224 = vmatpush1.msra.mxu0 0.0
    %225 = vmatprep.mubr.f32.mxu0 0.0
    %v226 = vand.u32 %v78, 4294901760
    %227 = vmatmul.mubr.f32.gmra.mrb[0].mxu0 %v226
    %v228 = vpop.f32.mrb[0].mxu0
    %v229 = vadd.f32 %v153, %v228
    %v230 = vpop.f32.mrb[0].mxu0
    %231 = vdwg.mxu0
    %232 = vmatprep.subr.mxu0 0.0
    %v233 = vand.u32 %v75, 4294901760
    %v234 = vsub.f32 %v75, %v233
    %235 = vmatpush1.msra.mxu0 %v234
    %236 = vmatprep.subr.mxu0 0.0
    %237 = vmatpush1.msra.mxu0 0.0
    %238 = vmatprep.subr.mxu0 0.0
    %239 = vmatpush1.msra.mxu0 0.0
    %240 = vmatprep.subr.mxu0 0.0
    %241 = vmatpush1.msra.mxu0 0.0
    %242 = vmatprep.subr.mxu0 0.0
    %243 = vmatpush1.msra.mxu0 0.0
    %244 = vmatprep.subr.mxu0 0.0
    %245 = vmatpush1.msra.mxu0 0.0
    %246 = vmatprep.subr.mxu0 0.0
    %247 = vmatpush1.msra.mxu0 0.0
    %248 = vmatprep.subr.mxu0 0.0
    %249 = vmatpush1.msra.mxu0 0.0
    %250 = vmatprep.subr.mxu0 0.0
    %251 = vmatpush1.msra.mxu0 0.0
    %252 = vmatprep.subr.mxu0 0.0
    %253 = vmatpush1.msra.mxu0 0.0
    %254 = vmatprep.subr.mxu0 0.0
    %255 = vmatpush1.msra.mxu0 0.0
    %256 = vmatprep.subr.mxu0 0.0
    %257 = vmatpush1.msra.mxu0 0.0
    %258 = vmatprep.subr.mxu0 0.0
    %259 = vmatpush1.msra.mxu0 0.0
    %260 = vmatprep.subr.mxu0 0.0
    %261 = vmatpush1.msra.mxu0 0.0
    %262 = vmatprep.subr.mxu0 0.0
    %263 = vmatpush1.msra.mxu0 0.0
    %264 = vmatprep.subr.mxu0 0.0
    %265 = vmatpush1.msra.mxu0 0.0
    %266 = vmatprep.subr.mxu0 0.0
    %267 = vmatpush1.msra.mxu0 0.0
    %268 = vmatprep.subr.mxu0 0.0
    %269 = vmatpush1.msra.mxu0 0.0
    %270 = vmatprep.subr.mxu0 0.0
    %271 = vmatpush1.msra.mxu0 0.0
    %272 = vmatprep.subr.mxu0 0.0
    %273 = vmatpush1.msra.mxu0 0.0
    %274 = vmatprep.subr.mxu0 0.0
    %275 = vmatpush1.msra.mxu0 0.0
    %276 = vmatprep.subr.mxu0 0.0
    %277 = vmatpush1.msra.mxu0 0.0
    %278 = vmatprep.subr.mxu0 0.0
    %279 = vmatpush1.msra.mxu0 0.0
    %280 = vmatprep.subr.mxu0 0.0
    %281 = vmatpush1.msra.mxu0 0.0
    %282 = vmatprep.subr.mxu0 0.0
    %283 = vmatpush1.msra.mxu0 0.0
    %284 = vmatprep.subr.mxu0 0.0
    %285 = vmatpush1.msra.mxu0 0.0
    %286 = vmatprep.subr.mxu0 0.0
    %287 = vmatpush1.msra.mxu0 0.0
    %288 = vmatprep.subr.mxu0 0.0
    %289 = vmatpush1.msra.mxu0 0.0
    %290 = vmatprep.subr.mxu0 0.0
    %291 = vmatpush1.msra.mxu0 0.0
    %292 = vmatprep.subr.mxu0 0.0
    %293 = vmatpush1.msra.mxu0 0.0
    %294 = vmatprep.subr.mxu0 0.0
    %295 = vmatpush1.msra.mxu0 0.0
    %296 = vmatprep.subr.mxu0 0.0
    %297 = vmatpush1.msra.mxu0 0.0
    %298 = vmatprep.mubr.f32.mxu0 0.0
    %v299 = vand.u32 %v78, 4294901760
    %v300 = vsub.f32 %v78, %v299
    %301 = vmatmul.mubr.f32.gmra.mrb[0].mxu0 %v300
    %v302 = vpop.f32.mrb[0].mxu0
    %v303 = vadd.f32 %v229, %v302
    %v304 = vpop.f32.mrb[0].mxu0
    %305 = vdwg.mxu0
    %306 = vmatprep.subr.mxu0 0.0
    %v307 = vand.u32 %v75, 4294901760
    %308 = vmatpush1.msra.mxu0 %v307
    %309 = vmatprep.subr.mxu0 0.0
    %310 = vmatpush1.msra.mxu0 0.0
    %311 = vmatprep.subr.mxu0 0.0
    %312 = vmatpush1.msra.mxu0 0.0
    %313 = vmatprep.subr.mxu0 0.0
    %314 = vmatpush1.msra.mxu0 0.0
    %315 = vmatprep.subr.mxu0 0.0
    %316 = vmatpush1.msra.mxu0 0.0
    %317 = vmatprep.subr.mxu0 0.0
    %318 = vmatpush1.msra.mxu0 0.0
    %319 = vmatprep.subr.mxu0 0.0
    %320 = vmatpush1.msra.mxu0 0.0
    %321 = vmatprep.subr.mxu0 0.0
    %322 = vmatpush1.msra.mxu0 0.0
    %323 = vmatprep.subr.mxu0 0.0
    %324 = vmatpush1.msra.mxu0 0.0
    %325 = vmatprep.subr.mxu0 0.0
    %326 = vmatpush1.msra.mxu0 0.0
    %327 = vmatprep.subr.mxu0 0.0
    %328 = vmatpush1.msra.mxu0 0.0
    %329 = vmatprep.subr.mxu0 0.0
    %330 = vmatpush1.msra.mxu0 0.0
    %331 = vmatprep.subr.mxu0 0.0
    %332 = vmatpush1.msra.mxu0 0.0
    %333 = vmatprep.subr.mxu0 0.0
    %334 = vmatpush1.msra.mxu0 0.0
    %335 = vmatprep.subr.mxu0 0.0
    %336 = vmatpush1.msra.mxu0 0.0
    %337 = vmatprep.subr.mxu0 0.0
    %338 = vmatpush1.msra.mxu0 0.0
    %339 = vmatprep.subr.mxu0 0.0
    %340 = vmatpush1.msra.mxu0 0.0
    %341 = vmatprep.subr.mxu0 0.0
    %342 = vmatpush1.msra.mxu0 0.0
    %343 = vmatprep.subr.mxu0 0.0
    %344 = vmatpush1.msra.mxu0 0.0
    %345 = vmatprep.subr.mxu0 0.0
    %346 = vmatpush1.msra.mxu0 0.0
    %347 = vmatprep.subr.mxu0 0.0
    %348 = vmatpush1.msra.mxu0 0.0
    %349 = vmatprep.subr.mxu0 0.0
    %350 = vmatpush1.msra.mxu0 0.0
    %351 = vmatprep.subr.mxu0 0.0
    %352 = vmatpush1.msra.mxu0 0.0
    %353 = vmatprep.subr.mxu0 0.0
    %354 = vmatpush1.msra.mxu0 0.0
    %355 = vmatprep.subr.mxu0 0.0
    %356 = vmatpush1.msra.mxu0 0.0
    %357 = vmatprep.subr.mxu0 0.0
    %358 = vmatpush1.msra.mxu0 0.0
    %359 = vmatprep.subr.mxu0 0.0
    %360 = vmatpush1.msra.mxu0 0.0
    %361 = vmatprep.subr.mxu0 0.0
    %362 = vmatpush1.msra.mxu0 0.0
    %363 = vmatprep.subr.mxu0 0.0
    %364 = vmatpush1.msra.mxu0 0.0
    %365 = vmatprep.subr.mxu0 0.0
    %366 = vmatpush1.msra.mxu0 0.0
    %367 = vmatprep.subr.mxu0 0.0
    %368 = vmatpush1.msra.mxu0 0.0
    %369 = vmatprep.subr.mxu0 0.0
    %370 = vmatpush1.msra.mxu0 0.0
    %371 = vmatprep.mubr.f32.mxu0 0.0
    %v372 = vand.u32 %v78, 4294901760
    %v373 = vsub.f32 %v78, %v372
    %v374 = vand.u32 %v373, 4294901760
    %375 = vmatmul.mubr.f32.gmra.mrb[0].mxu0 %v374
    %v376 = vpop.f32.mrb[0].mxu0
    %v377 = vadd.f32 %v303, %v376
    %v378 = vpop.f32.mrb[0].mxu0
    %379 = vdwg.mxu0
    %380 = vmatprep.subr.mxu0 0.0
    %v381 = vand.u32 %v75, 4294901760
    %v382 = vsub.f32 %v75, %v381
    %v383 = vand.u32 %v382, 4294901760
    %384 = vmatpush1.msra.mxu0 %v383
    %385 = vmatprep.subr.mxu0 0.0
    %386 = vmatpush1.msra.mxu0 0.0
    %387 = vmatprep.subr.mxu0 0.0
    %388 = vmatpush1.msra.mxu0 0.0
    %389 = vmatprep.subr.mxu0 0.0
    %390 = vmatpush1.msra.mxu0 0.0
    %391 = vmatprep.subr.mxu0 0.0
    %392 = vmatpush1.msra.mxu0 0.0
    %393 = vmatprep.subr.mxu0 0.0
    %394 = vmatpush1.msra.mxu0 0.0
    %395 = vmatprep.subr.mxu0 0.0
    %396 = vmatpush1.msra.mxu0 0.0
    %397 = vmatprep.subr.mxu0 0.0
    %398 = vmatpush1.msra.mxu0 0.0
    %399 = vmatprep.subr.mxu0 0.0
    %400 = vmatpush1.msra.mxu0 0.0
    %401 = vmatprep.subr.mxu0 0.0
    %402 = vmatpush1.msra.mxu0 0.0
    %403 = vmatprep.subr.mxu0 0.0
    %404 = vmatpush1.msra.mxu0 0.0
    %405 = vmatprep.subr.mxu0 0.0
    %406 = vmatpush1.msra.mxu0 0.0
    %407 = vmatprep.subr.mxu0 0.0
    %408 = vmatpush1.msra.mxu0 0.0
    %409 = vmatprep.subr.mxu0 0.0
    %410 = vmatpush1.msra.mxu0 0.0
    %411 = vmatprep.subr.mxu0 0.0
    %412 = vmatpush1.msra.mxu0 0.0
    %413 = vmatprep.subr.mxu0 0.0
    %414 = vmatpush1.msra.mxu0 0.0
    %415 = vmatprep.subr.mxu0 0.0
    %416 = vmatpush1.msra.mxu0 0.0
    %417 = vmatprep.subr.mxu0 0.0
    %418 = vmatpush1.msra.mxu0 0.0
    %419 = vmatprep.subr.mxu0 0.0
    %420 = vmatpush1.msra.mxu0 0.0
    %421 = vmatprep.subr.mxu0 0.0
    %422 = vmatpush1.msra.mxu0 0.0
    %423 = vmatprep.subr.mxu0 0.0
    %424 = vmatpush1.msra.mxu0 0.0
    %425 = vmatprep.subr.mxu0 0.0
    %426 = vmatpush1.msra.mxu0 0.0
    %427 = vmatprep.subr.mxu0 0.0
    %428 = vmatpush1.msra.mxu0 0.0
    %429 = vmatprep.subr.mxu0 0.0
    %430 = vmatpush1.msra.mxu0 0.0
    %431 = vmatprep.subr.mxu0 0.0
    %432 = vmatpush1.msra.mxu0 0.0
    %433 = vmatprep.subr.mxu0 0.0
    %434 = vmatpush1.msra.mxu0 0.0
    %435 = vmatprep.subr.mxu0 0.0
    %436 = vmatpush1.msra.mxu0 0.0
    %437 = vmatprep.subr.mxu0 0.0
    %438 = vmatpush1.msra.mxu0 0.0
    %439 = vmatprep.subr.mxu0 0.0
    %440 = vmatpush1.msra.mxu0 0.0
    %441 = vmatprep.subr.mxu0 0.0
    %442 = vmatpush1.msra.mxu0 0.0
    %443 = vmatprep.subr.mxu0 0.0
    %444 = vmatpush1.msra.mxu0 0.0
    %445 = vmatprep.subr.mxu0 0.0
    %446 = vmatpush1.msra.mxu0 0.0
    %447 = vmatprep.mubr.f32.mxu0 0.0
    %v448 = vand.u32 %v78, 4294901760
    %449 = vmatmul.mubr.f32.gmra.mrb[0].mxu0 %v448
    %v450 = vpop.f32.mrb[0].mxu0
    %v451 = vadd.f32 %v377, %v450
    %v452 = vpop.f32.mrb[0].mxu0
    %453 = vdwg.mxu0
    %454 = vmatprep.subr.mxu0 0.0
    %v455 = vand.u32 %v75, 4294901760
    %456 = vmatpush1.msra.mxu0 %v455
    %457 = vmatprep.subr.mxu0 0.0
    %458 = vmatpush1.msra.mxu0 0.0
    %459 = vmatprep.subr.mxu0 0.0
    %460 = vmatpush1.msra.mxu0 0.0
    %461 = vmatprep.subr.mxu0 0.0
    %462 = vmatpush1.msra.mxu0 0.0
    %463 = vmatprep.subr.mxu0 0.0
    %464 = vmatpush1.msra.mxu0 0.0
    %465 = vmatprep.subr.mxu0 0.0
    %466 = vmatpush1.msra.mxu0 0.0
    %467 = vmatprep.subr.mxu0 0.0
    %468 = vmatpush1.msra.mxu0 0.0
    %469 = vmatprep.subr.mxu0 0.0
    %470 = vmatpush1.msra.mxu0 0.0
    %471 = vmatprep.subr.mxu0 0.0
    %472 = vmatpush1.msra.mxu0 0.0
    %473 = vmatprep.subr.mxu0 0.0
    %474 = vmatpush1.msra.mxu0 0.0
    %475 = vmatprep.subr.mxu0 0.0
    %476 = vmatpush1.msra.mxu0 0.0
    %477 = vmatprep.subr.mxu0 0.0
    %478 = vmatpush1.msra.mxu0 0.0
    %479 = vmatprep.subr.mxu0 0.0
    %480 = vmatpush1.msra.mxu0 0.0
    %481 = vmatprep.subr.mxu0 0.0
    %482 = vmatpush1.msra.mxu0 0.0
    %483 = vmatprep.subr.mxu0 0.0
    %484 = vmatpush1.msra.mxu0 0.0
    %485 = vmatprep.subr.mxu0 0.0
    %486 = vmatpush1.msra.mxu0 0.0
    %487 = vmatprep.subr.mxu0 0.0
    %488 = vmatpush1.msra.mxu0 0.0
    %489 = vmatprep.subr.mxu0 0.0
    %490 = vmatpush1.msra.mxu0 0.0
    %491 = vmatprep.subr.mxu0 0.0
    %492 = vmatpush1.msra.mxu0 0.0
    %493 = vmatprep.subr.mxu0 0.0
    %494 = vmatpush1.msra.mxu0 0.0
    %495 = vmatprep.subr.mxu0 0.0
    %496 = vmatpush1.msra.mxu0 0.0
    %497 = vmatprep.subr.mxu0 0.0
    %498 = vmatpush1.msra.mxu0 0.0
    %499 = vmatprep.subr.mxu0 0.0
    %500 = vmatpush1.msra.mxu0 0.0
    %501 = vmatprep.subr.mxu0 0.0
    %502 = vmatpush1.msra.mxu0 0.0
    %503 = vmatprep.subr.mxu0 0.0
    %504 = vmatpush1.msra.mxu0 0.0
    %505 = vmatprep.subr.mxu0 0.0
    %506 = vmatpush1.msra.mxu0 0.0
    %507 = vmatprep.subr.mxu0 0.0
    %508 = vmatpush1.msra.mxu0 0.0
    %509 = vmatprep.subr.mxu0 0.0
    %510 = vmatpush1.msra.mxu0 0.0
    %511 = vmatprep.subr.mxu0 0.0
    %512 = vmatpush1.msra.mxu0 0.0
    %513 = vmatprep.subr.mxu0 0.0
    %514 = vmatpush1.msra.mxu0 0.0
    %515 = vmatprep.subr.mxu0 0.0
    %516 = vmatpush1.msra.mxu0 0.0
    %517 = vmatprep.subr.mxu0 0.0
    %518 = vmatpush1.msra.mxu0 0.0
    %519 = vmatprep.mubr.f32.mxu0 0.0
    %v520 = vand.u32 %v78, 4294901760
    %521 = vmatmul.mubr.f32.gmra.mrb[0].mxu0 %v520
    %v522 = vpop.f32.mrb[0].mxu0
    %v523 = vadd.f32 %v451, %v522
    %v524 = vpop.f32.mrb[0].mxu0
    %525 = vdwg.mxu0
    %v526 = vld [vmem:[%s3] sm:$0xff]
    %v528 = vsel %vm76, %v74, 0
    %530 = vmatprep.subr.mxu0 0.0
    %v531 = vand.u32 %v526, 4294901760
    %532 = vmatpush1.msra.mxu0 %v531
    %533 = vmatprep.subr.mxu0 0.0
    %534 = vmatpush1.msra.mxu0 0.0
    %535 = vmatprep.subr.mxu0 0.0
    %536 = vmatpush1.msra.mxu0 0.0
    %537 = vmatprep.subr.mxu0 0.0
    %538 = vmatpush1.msra.mxu0 0.0
    %539 = vmatprep.subr.mxu0 0.0
    %540 = vmatpush1.msra.mxu0 0.0
    %541 = vmatprep.subr.mxu0 0.0
    %542 = vmatpush1.msra.mxu0 0.0
    %543 = vmatprep.subr.mxu0 0.0
    %544 = vmatpush1.msra.mxu0 0.0
    %545 = vmatprep.subr.mxu0 0.0
    %546 = vmatpush1.msra.mxu0 0.0
    %547 = vmatprep.subr.mxu0 0.0
    %548 = vmatpush1.msra.mxu0 0.0
    %549 = vmatprep.subr.mxu0 0.0
    %550 = vmatpush1.msra.mxu0 0.0
    %551 = vmatprep.subr.mxu0 0.0
    %552 = vmatpush1.msra.mxu0 0.0
    %553 = vmatprep.subr.mxu0 0.0
    %554 = vmatpush1.msra.mxu0 0.0
    %555 = vmatprep.subr.mxu0 0.0
    %556 = vmatpush1.msra.mxu0 0.0
    %557 = vmatprep.subr.mxu0 0.0
    %558 = vmatpush1.msra.mxu0 0.0
    %559 = vmatprep.subr.mxu0 0.0
    %560 = vmatpush1.msra.mxu0 0.0
    %561 = vmatprep.subr.mxu0 0.0
    %562 = vmatpush1.msra.mxu0 0.0
    %563 = vmatprep.subr.mxu0 0.0
    %564 = vmatpush1.msra.mxu0 0.0
    %565 = vmatprep.subr.mxu0 0.0
    %566 = vmatpush1.msra.mxu0 0.0
    %567 = vmatprep.subr.mxu0 0.0
    %568 = vmatpush1.msra.mxu0 0.0
    %569 = vmatprep.subr.mxu0 0.0
    %570 = vmatpush1.msra.mxu0 0.0
    %571 = vmatprep.subr.mxu0 0.0
    %572 = vmatpush1.msra.mxu0 0.0
    %573 = vmatprep.subr.mxu0 0.0
    %574 = vmatpush1.msra.mxu0 0.0
    %575 = vmatprep.subr.mxu0 0.0
    %576 = vmatpush1.msra.mxu0 0.0
    %577 = vmatprep.subr.mxu0 0.0
    %578 = vmatpush1.msra.mxu0 0.0
    %579 = vmatprep.subr.mxu0 0.0
    %580 = vmatpush1.msra.mxu0 0.0
    %581 = vmatprep.subr.mxu0 0.0
    %582 = vmatpush1.msra.mxu0 0.0
    %583 = vmatprep.subr.mxu0 0.0
    %584 = vmatpush1.msra.mxu0 0.0
    %585 = vmatprep.subr.mxu0 0.0
    %586 = vmatpush1.msra.mxu0 0.0
    %587 = vmatprep.subr.mxu0 0.0
    %588 = vmatpush1.msra.mxu0 0.0
    %589 = vmatprep.subr.mxu0 0.0
    %590 = vmatpush1.msra.mxu0 0.0
    %591 = vmatprep.subr.mxu0 0.0
    %592 = vmatpush1.msra.mxu0 0.0
    %593 = vmatprep.subr.mxu0 0.0
    %594 = vmatpush1.msra.mxu0 0.0
    %595 = vmatprep.mubr.f32.mxu0 0.0
    %v596 = vand.u32 %v528, 4294901760
    %v597 = vsub.f32 %v528, %v596
    %v598 = vand.u32 %v597, 4294901760
    %v599 = vsub.f32 %v597, %v598
    %v600 = vand.u32 %v599, 4294901760
    %601 = vmatmul.mubr.f32.gmra.mrb[0].mxu0 %v600
    %v602 = vpop.f32.mrb[0].mxu0
    %v603 = vadd.f32 0.0, %v602
    %v604 = vpop.f32.mrb[0].mxu0
    %605 = vdwg.mxu0
    %606 = vmatprep.subr.mxu0 0.0
    %v607 = vand.u32 %v526, 4294901760
    %v608 = vsub.f32 %v526, %v607
    %v609 = vand.u32 %v608, 4294901760
    %v610 = vsub.f32 %v608, %v609
    %v611 = vand.u32 %v610, 4294901760
    %612 = vmatpush1.msra.mxu0 %v611
    %613 = vmatprep.subr.mxu0 0.0
    %614 = vmatpush1.msra.mxu0 0.0
    %615 = vmatprep.subr.mxu0 0.0
    %616 = vmatpush1.msra.mxu0 0.0
    %617 = vmatprep.subr.mxu0 0.0
    %618 = vmatpush1.msra.mxu0 0.0
    %619 = vmatprep.subr.mxu0 0.0
    %620 = vmatpush1.msra.mxu0 0.0
    %621 = vmatprep.subr.mxu0 0.0
    %622 = vmatpush1.msra.mxu0 0.0
    %623 = vmatprep.subr.mxu0 0.0
    %624 = vmatpush1.msra.mxu0 0.0
    %625 = vmatprep.subr.mxu0 0.0
    %626 = vmatpush1.msra.mxu0 0.0
    %627 = vmatprep.subr.mxu0 0.0
    %628 = vmatpush1.msra.mxu0 0.0
    %629 = vmatprep.subr.mxu0 0.0
    %630 = vmatpush1.msra.mxu0 0.0
    %631 = vmatprep.subr.mxu0 0.0
    %632 = vmatpush1.msra.mxu0 0.0
    %633 = vmatprep.subr.mxu0 0.0
    %634 = vmatpush1.msra.mxu0 0.0
    %635 = vmatprep.subr.mxu0 0.0
    %636 = vmatpush1.msra.mxu0 0.0
    %637 = vmatprep.subr.mxu0 0.0
    %638 = vmatpush1.msra.mxu0 0.0
    %639 = vmatprep.subr.mxu0 0.0
    %640 = vmatpush1.msra.mxu0 0.0
    %641 = vmatprep.subr.mxu0 0.0
    %642 = vmatpush1.msra.mxu0 0.0
    %643 = vmatprep.subr.mxu0 0.0
    %644 = vmatpush1.msra.mxu0 0.0
    %645 = vmatprep.subr.mxu0 0.0
    %646 = vmatpush1.msra.mxu0 0.0
    %647 = vmatprep.subr.mxu0 0.0
    %648 = vmatpush1.msra.mxu0 0.0
    %649 = vmatprep.subr.mxu0 0.0
    %650 = vmatpush1.msra.mxu0 0.0
    %651 = vmatprep.subr.mxu0 0.0
    %652 = vmatpush1.msra.mxu0 0.0
    %653 = vmatprep.subr.mxu0 0.0
    %654 = vmatpush1.msra.mxu0 0.0
    %655 = vmatprep.subr.mxu0 0.0
    %656 = vmatpush1.msra.mxu0 0.0
    %657 = vmatprep.subr.mxu0 0.0
    %658 = vmatpush1.msra.mxu0 0.0
    %659 = vmatprep.subr.mxu0 0.0
    %660 = vmatpush1.msra.mxu0 0.0
    %661 = vmatprep.subr.mxu0 0.0
    %662 = vmatpush1.msra.mxu0 0.0
    %663 = vmatprep.subr.mxu0 0.0
    %664 = vmatpush1.msra.mxu0 0.0
    %665 = vmatprep.subr.mxu0 0.0
    %666 = vmatpush1.msra.mxu0 0.0
    %667 = vmatprep.subr.mxu0 0.0
    %668 = vmatpush1.msra.mxu0 0.0
    %669 = vmatprep.subr.mxu0 0.0
    %670 = vmatpush1.msra.mxu0 0.0
    %671 = vmatprep.subr.mxu0 0.0
    %672 = vmatpush1.msra.mxu0 0.0
    %673 = vmatprep.subr.mxu0 0.0
    %674 = vmatpush1.msra.mxu0 0.0
    %675 = vmatprep.mubr.f32.mxu0 0.0
    %v676 = vand.u32 %v528, 4294901760
    %677 = vmatmul.mubr.f32.gmra.mrb[0].mxu0 %v676
    %v678 = vpop.f32.mrb[0].mxu0
    %v679 = vadd.f32 %v603, %v678
    %v680 = vpop.f32.mrb[0].mxu0
    %681 = vdwg.mxu0
    %682 = vmatprep.subr.mxu0 0.0
    %v683 = vand.u32 %v526, 4294901760
    %v684 = vsub.f32 %v526, %v683
    %685 = vmatpush1.msra.mxu0 %v684
    %686 = vmatprep.subr.mxu0 0.0
    %687 = vmatpush1.msra.mxu0 0.0
    %688 = vmatprep.subr.mxu0 0.0
    %689 = vmatpush1.msra.mxu0 0.0
    %690 = vmatprep.subr.mxu0 0.0
    %691 = vmatpush1.msra.mxu0 0.0
    %692 = vmatprep.subr.mxu0 0.0
    %693 = vmatpush1.msra.mxu0 0.0
    %694 = vmatprep.subr.mxu0 0.0
    %695 = vmatpush1.msra.mxu0 0.0
    %696 = vmatprep.subr.mxu0 0.0
    %697 = vmatpush1.msra.mxu0 0.0
    %698 = vmatprep.subr.mxu0 0.0
    %699 = vmatpush1.msra.mxu0 0.0
    %700 = vmatprep.subr.mxu0 0.0
    %701 = vmatpush1.msra.mxu0 0.0
    %702 = vmatprep.subr.mxu0 0.0
    %703 = vmatpush1.msra.mxu0 0.0
    %704 = vmatprep.subr.mxu0 0.0
    %705 = vmatpush1.msra.mxu0 0.0
    %706 = vmatprep.subr.mxu0 0.0
    %707 = vmatpush1.msra.mxu0 0.0
    %708 = vmatprep.subr.mxu0 0.0
    %709 = vmatpush1.msra.mxu0 0.0
    %710 = vmatprep.subr.mxu0 0.0
    %711 = vmatpush1.msra.mxu0 0.0
    %712 = vmatprep.subr.mxu0 0.0
    %713 = vmatpush1.msra.mxu0 0.0
    %714 = vmatprep.subr.mxu0 0.0
    %715 = vmatpush1.msra.mxu0 0.0
    %716 = vmatprep.subr.mxu0 0.0
    %717 = vmatpush1.msra.mxu0 0.0
    %718 = vmatprep.subr.mxu0 0.0
    %719 = vmatpush1.msra.mxu0 0.0
    %720 = vmatprep.subr.mxu0 0.0
    %721 = vmatpush1.msra.mxu0 0.0
    %722 = vmatprep.subr.mxu0 0.0
    %723 = vmatpush1.msra.mxu0 0.0
    %724 = vmatprep.subr.mxu0 0.0
    %725 = vmatpush1.msra.mxu0 0.0
    %726 = vmatprep.subr.mxu0 0.0
    %727 = vmatpush1.msra.mxu0 0.0
    %728 = vmatprep.subr.mxu0 0.0
    %729 = vmatpush1.msra.mxu0 0.0
    %730 = vmatprep.subr.mxu0 0.0
    %731 = vmatpush1.msra.mxu0 0.0
    %732 = vmatprep.subr.mxu0 0.0
    %733 = vmatpush1.msra.mxu0 0.0
    %734 = vmatprep.subr.mxu0 0.0
    %735 = vmatpush1.msra.mxu0 0.0
    %736 = vmatprep.subr.mxu0 0.0
    %737 = vmatpush1.msra.mxu0 0.0
    %738 = vmatprep.subr.mxu0 0.0
    %739 = vmatpush1.msra.mxu0 0.0
    %740 = vmatprep.subr.mxu0 0.0
    %741 = vmatpush1.msra.mxu0 0.0
    %742 = vmatprep.subr.mxu0 0.0
    %743 = vmatpush1.msra.mxu0 0.0
    %744 = vmatprep.subr.mxu0 0.0
    %745 = vmatpush1.msra.mxu0 0.0
    %746 = vmatprep.subr.mxu0 0.0
    %747 = vmatpush1.msra.mxu0 0.0
    %748 = vmatprep.mubr.f32.mxu0 0.0
    %v749 = vand.u32 %v528, 4294901760
    %v750 = vsub.f32 %v528, %v749
    %751 = vmatmul.mubr.f32.gmra.mrb[0].mxu0 %v750
    %v752 = vpop.f32.mrb[0].mxu0
    %v753 = vadd.f32 %v679, %v752
    %v754 = vpop.f32.mrb[0].mxu0
    %755 = vdwg.mxu0
    %756 = vmatprep.subr.mxu0 0.0
    %v757 = vand.u32 %v526, 4294901760
    %758 = vmatpush1.msra.mxu0 %v757
    %759 = vmatprep.subr.mxu0 0.0
    %760 = vmatpush1.msra.mxu0 0.0
    %761 = vmatprep.subr.mxu0 0.0
    %762 = vmatpush1.msra.mxu0 0.0
    %763 = vmatprep.subr.mxu0 0.0
    %764 = vmatpush1.msra.mxu0 0.0
    %765 = vmatprep.subr.mxu0 0.0
    %766 = vmatpush1.msra.mxu0 0.0
    %767 = vmatprep.subr.mxu0 0.0
    %768 = vmatpush1.msra.mxu0 0.0
    %769 = vmatprep.subr.mxu0 0.0
    %770 = vmatpush1.msra.mxu0 0.0
    %771 = vmatprep.subr.mxu0 0.0
    %772 = vmatpush1.msra.mxu0 0.0
    %773 = vmatprep.subr.mxu0 0.0
    %774 = vmatpush1.msra.mxu0 0.0
    %775 = vmatprep.subr.mxu0 0.0
    %776 = vmatpush1.msra.mxu0 0.0
    %777 = vmatprep.subr.mxu0 0.0
    %778 = vmatpush1.msra.mxu0 0.0
    %779 = vmatprep.subr.mxu0 0.0
    %780 = vmatpush1.msra.mxu0 0.0
    %781 = vmatprep.subr.mxu0 0.0
    %782 = vmatpush1.msra.mxu0 0.0
    %783 = vmatprep.subr.mxu0 0.0
    %784 = vmatpush1.msra.mxu0 0.0
    %785 = vmatprep.subr.mxu0 0.0
    %786 = vmatpush1.msra.mxu0 0.0
    %787 = vmatprep.subr.mxu0 0.0
    %788 = vmatpush1.msra.mxu0 0.0
    %789 = vmatprep.subr.mxu0 0.0
    %790 = vmatpush1.msra.mxu0 0.0
    %791 = vmatprep.subr.mxu0 0.0
    %792 = vmatpush1.msra.mxu0 0.0
    %793 = vmatprep.subr.mxu0 0.0
    %794 = vmatpush1.msra.mxu0 0.0
    %795 = vmatprep.subr.mxu0 0.0
    %796 = vmatpush1.msra.mxu0 0.0
    %797 = vmatprep.subr.mxu0 0.0
    %798 = vmatpush1.msra.mxu0 0.0
    %799 = vmatprep.subr.mxu0 0.0
    %800 = vmatpush1.msra.mxu0 0.0
    %801 = vmatprep.subr.mxu0 0.0
    %802 = vmatpush1.msra.mxu0 0.0
    %803 = vmatprep.subr.mxu0 0.0
    %804 = vmatpush1.msra.mxu0 0.0
    %805 = vmatprep.subr.mxu0 0.0
    %806 = vmatpush1.msra.mxu0 0.0
    %807 = vmatprep.subr.mxu0 0.0
    %808 = vmatpush1.msra.mxu0 0.0
    %809 = vmatprep.subr.mxu0 0.0
    %810 = vmatpush1.msra.mxu0 0.0
    %811 = vmatprep.subr.mxu0 0.0
    %812 = vmatpush1.msra.mxu0 0.0
    %813 = vmatprep.subr.mxu0 0.0
    %814 = vmatpush1.msra.mxu0 0.0
    %815 = vmatprep.subr.mxu0 0.0
    %816 = vmatpush1.msra.mxu0 0.0
    %817 = vmatprep.subr.mxu0 0.0
    %818 = vmatpush1.msra.mxu0 0.0
    %819 = vmatprep.subr.mxu0 0.0
    %820 = vmatpush1.msra.mxu0 0.0
    %821 = vmatprep.mubr.f32.mxu0 0.0
    %v822 = vand.u32 %v528, 4294901760
    %v823 = vsub.f32 %v528, %v822
    %v824 = vand.u32 %v823, 4294901760
    %825 = vmatmul.mubr.f32.gmra.mrb[0].mxu0 %v824
    %v826 = vpop.f32.mrb[0].mxu0
    %v827 = vadd.f32 %v753, %v826
    %v828 = vpop.f32.mrb[0].mxu0
    %829 = vdwg.mxu0
    %830 = vmatprep.subr.mxu0 0.0
    %v831 = vand.u32 %v526, 4294901760
    %v832 = vsub.f32 %v526, %v831
    %v833 = vand.u32 %v832, 4294901760
    %834 = vmatpush1.msra.mxu0 %v833
    %835 = vmatprep.subr.mxu0 0.0
    %836 = vmatpush1.msra.mxu0 0.0
    %837 = vmatprep.subr.mxu0 0.0
    %838 = vmatpush1.msra.mxu0 0.0
    %839 = vmatprep.subr.mxu0 0.0
    %840 = vmatpush1.msra.mxu0 0.0
    %841 = vmatprep.subr.mxu0 0.0
    %842 = vmatpush1.msra.mxu0 0.0
    %843 = vmatprep.subr.mxu0 0.0
    %844 = vmatpush1.msra.mxu0 0.0
    %845 = vmatprep.subr.mxu0 0.0
    %846 = vmatpush1.msra.mxu0 0.0
    %847 = vmatprep.subr.mxu0 0.0
    %848 = vmatpush1.msra.mxu0 0.0
    %849 = vmatprep.subr.mxu0 0.0
    %850 = vmatpush1.msra.mxu0 0.0
    %851 = vmatprep.subr.mxu0 0.0
    %852 = vmatpush1.msra.mxu0 0.0
    %853 = vmatprep.subr.mxu0 0.0
    %854 = vmatpush1.msra.mxu0 0.0
    %855 = vmatprep.subr.mxu0 0.0
    %856 = vmatpush1.msra.mxu0 0.0
    %857 = vmatprep.subr.mxu0 0.0
    %858 = vmatpush1.msra.mxu0 0.0
    %859 = vmatprep.subr.mxu0 0.0
    %860 = vmatpush1.msra.mxu0 0.0
    %861 = vmatprep.subr.mxu0 0.0
    %862 = vmatpush1.msra.mxu0 0.0
    %863 = vmatprep.subr.mxu0 0.0
    %864 = vmatpush1.msra.mxu0 0.0
    %865 = vmatprep.subr.mxu0 0.0
    %866 = vmatpush1.msra.mxu0 0.0
    %867 = vmatprep.subr.mxu0 0.0
    %868 = vmatpush1.msra.mxu0 0.0
    %869 = vmatprep.subr.mxu0 0.0
    %870 = vmatpush1.msra.mxu0 0.0
    %871 = vmatprep.subr.mxu0 0.0
    %872 = vmatpush1.msra.mxu0 0.0
    %873 = vmatprep.subr.mxu0 0.0
    %874 = vmatpush1.msra.mxu0 0.0
    %875 = vmatprep.subr.mxu0 0.0
    %876 = vmatpush1.msra.mxu0 0.0
    %877 = vmatprep.subr.mxu0 0.0
    %878 = vmatpush1.msra.mxu0 0.0
    %879 = vmatprep.subr.mxu0 0.0
    %880 = vmatpush1.msra.mxu0 0.0
    %881 = vmatprep.subr.mxu0 0.0
    %882 = vmatpush1.msra.mxu0 0.0
    %883 = vmatprep.subr.mxu0 0.0
    %884 = vmatpush1.msra.mxu0 0.0
    %885 = vmatprep.subr.mxu0 0.0
    %886 = vmatpush1.msra.mxu0 0.0
    %887 = vmatprep.subr.mxu0 0.0
    %888 = vmatpush1.msra.mxu0 0.0
    %889 = vmatprep.subr.mxu0 0.0
    %890 = vmatpush1.msra.mxu0 0.0
    %891 = vmatprep.subr.mxu0 0.0
    %892 = vmatpush1.msra.mxu0 0.0
    %893 = vmatprep.subr.mxu0 0.0
    %894 = vmatpush1.msra.mxu0 0.0
    %895 = vmatprep.subr.mxu0 0.0
    %896 = vmatpush1.msra.mxu0 0.0
    %897 = vmatprep.mubr.f32.mxu0 0.0
    %v898 = vand.u32 %v528, 4294901760
    %899 = vmatmul.mubr.f32.gmra.mrb[0].mxu0 %v898
    %v900 = vpop.f32.mrb[0].mxu0
    %v901 = vadd.f32 %v827, %v900
    %v902 = vpop.f32.mrb[0].mxu0
    %903 = vdwg.mxu0
    %904 = vmatprep.subr.mxu0 0.0
    %v905 = vand.u32 %v526, 4294901760
    %906 = vmatpush1.msra.mxu0 %v905
    %907 = vmatprep.subr.mxu0 0.0
    %908 = vmatpush1.msra.mxu0 0.0
    %909 = vmatprep.subr.mxu0 0.0
    %910 = vmatpush1.msra.mxu0 0.0
    %911 = vmatprep.subr.mxu0 0.0
    %912 = vmatpush1.msra.mxu0 0.0
    %913 = vmatprep.subr.mxu0 0.0
    %914 = vmatpush1.msra.mxu0 0.0
    %915 = vmatprep.subr.mxu0 0.0
    %916 = vmatpush1.msra.mxu0 0.0
    %917 = vmatprep.subr.mxu0 0.0
    %918 = vmatpush1.msra.mxu0 0.0
    %919 = vmatprep.subr.mxu0 0.0
    %920 = vmatpush1.msra.mxu0 0.0
    %921 = vmatprep.subr.mxu0 0.0
    %922 = vmatpush1.msra.mxu0 0.0
    %923 = vmatprep.subr.mxu0 0.0
    %924 = vmatpush1.msra.mxu0 0.0
    %925 = vmatprep.subr.mxu0 0.0
    %926 = vmatpush1.msra.mxu0 0.0
    %927 = vmatprep.subr.mxu0 0.0
    %928 = vmatpush1.msra.mxu0 0.0
    %929 = vmatprep.subr.mxu0 0.0
    %930 = vmatpush1.msra.mxu0 0.0
    %931 = vmatprep.subr.mxu0 0.0
    %932 = vmatpush1.msra.mxu0 0.0
    %933 = vmatprep.subr.mxu0 0.0
    %934 = vmatpush1.msra.mxu0 0.0
    %935 = vmatprep.subr.mxu0 0.0
    %936 = vmatpush1.msra.mxu0 0.0
    %937 = vmatprep.subr.mxu0 0.0
    %938 = vmatpush1.msra.mxu0 0.0
    %939 = vmatprep.subr.mxu0 0.0
    %940 = vmatpush1.msra.mxu0 0.0
    %941 = vmatprep.subr.mxu0 0.0
    %942 = vmatpush1.msra.mxu0 0.0
    %943 = vmatprep.subr.mxu0 0.0
    %944 = vmatpush1.msra.mxu0 0.0
    %945 = vmatprep.subr.mxu0 0.0
    %946 = vmatpush1.msra.mxu0 0.0
    %947 = vmatprep.subr.mxu0 0.0
    %948 = vmatpush1.msra.mxu0 0.0
    %949 = vmatprep.subr.mxu0 0.0
    %950 = vmatpush1.msra.mxu0 0.0
    %951 = vmatprep.subr.mxu0 0.0
    %952 = vmatpush1.msra.mxu0 0.0
    %953 = vmatprep.subr.mxu0 0.0
    %954 = vmatpush1.msra.mxu0 0.0
    %955 = vmatprep.subr.mxu0 0.0
    %956 = vmatpush1.msra.mxu0 0.0
    %957 = vmatprep.subr.mxu0 0.0
    %958 = vmatpush1.msra.mxu0 0.0
    %959 = vmatprep.subr.mxu0 0.0
    %960 = vmatpush1.msra.mxu0 0.0
    %961 = vmatprep.subr.mxu0 0.0
    %962 = vmatpush1.msra.mxu0 0.0
    %963 = vmatprep.subr.mxu0 0.0
    %964 = vmatpush1.msra.mxu0 0.0
    %965 = vmatprep.subr.mxu0 0.0
    %966 = vmatpush1.msra.mxu0 0.0
    %967 = vmatprep.subr.mxu0 0.0
    %968 = vmatpush1.msra.mxu0 0.0
    %969 = vmatprep.mubr.f32.mxu0 0.0
    %v970 = vand.u32 %v528, 4294901760
    %971 = vmatmul.mubr.f32.gmra.mrb[0].mxu0 %v970
    %v972 = vpop.f32.mrb[0].mxu0
    %v973 = vadd.f32 %v901, %v972
    %v974 = vpop.f32.mrb[0].mxu0
    %975 = vdwg.mxu0
    %v976 = vmul.f32 %v523, %v973
    %v977 = vld [vmem:[#allocation8] sm:$0xff]
    %v978 = vld [vmem:[#allocation8 + $0x8] sm:$0xff]
    %v979 = vld [vmem:[#allocation8 + $0x10] sm:$0xff]
    %v980 = vld [vmem:[#allocation8 + $0x18] sm:$0xff]
    %v981 = vld [vmem:[#allocation8 + $0x20] sm:$0xff]
    %v982 = vld [vmem:[#allocation8 + $0x28] sm:$0xff]
    %v983 = vld [vmem:[#allocation8 + $0x30] sm:$0xff]
    %v984 = vld [vmem:[#allocation8 + $0x38] sm:$0xff]
    %v985 = vld [vmem:[%s5] sm:$0x1]
    %v987 = vlaneseq
    %v988 = vshrl.u32 %v987, 7
    %v989 = vsub.s32 0, %v988
    %v990 = vrot.slane %v985, %v989
    %vm992 = vcmask 523264
    %v994 = vsel %vm992, %v976, 0
    %996 = vmatprep.subr.mxu0 0.0
    %v997 = vand.u32 %v977, 4294901760
    %998 = vmatpush1.msra.mxu0 %v997
    %999 = vmatprep.subr.mxu0 0.0
    %v1000 = vand.u32 %v978, 4294901760
    %1001 = vmatpush1.msra.mxu0 %v1000
    %1002 = vmatprep.subr.mxu0 0.0
    %v1003 = vand.u32 %v979, 4294901760
    %1004 = vmatpush1.msra.mxu0 %v1003
    %1005 = vmatprep.subr.mxu0 0.0
    %v1006 = vand.u32 %v980, 4294901760
    %1007 = vmatpush1.msra.mxu0 %v1006
    %1008 = vmatprep.subr.mxu0 0.0
    %v1009 = vand.u32 %v981, 4294901760
    %1010 = vmatpush1.msra.mxu0 %v1009
    %1011 = vmatprep.subr.mxu0 0.0
    %v1012 = vand.u32 %v982, 4294901760
    %1013 = vmatpush1.msra.mxu0 %v1012
    %1014 = vmatprep.subr.mxu0 0.0
    %v1015 = vand.u32 %v983, 4294901760
    %1016 = vmatpush1.msra.mxu0 %v1015
    %1017 = vmatprep.subr.mxu0 0.0
    %v1018 = vand.u32 %v984, 4294901760
    %1019 = vmatpush1.msra.mxu0 %v1018
    %1020 = vmatprep.subr.mxu0 0.0
    %1021 = vmatpush1.msra.mxu0 0.0
    %1022 = vmatprep.subr.mxu0 0.0
    %1023 = vmatpush1.msra.mxu0 0.0
    %1024 = vmatprep.subr.mxu0 0.0
    %1025 = vmatpush1.msra.mxu0 0.0
    %1026 = vmatprep.subr.mxu0 0.0
    %1027 = vmatpush1.msra.mxu0 0.0
    %1028 = vmatprep.subr.mxu0 0.0
    %1029 = vmatpush1.msra.mxu0 0.0
    %1030 = vmatprep.subr.mxu0 0.0
    %1031 = vmatpush1.msra.mxu0 0.0
    %1032 = vmatprep.subr.mxu0 0.0
    %1033 = vmatpush1.msra.mxu0 0.0
    %1034 = vmatprep.subr.mxu0 0.0
    %1035 = vmatpush1.msra.mxu0 0.0
    %1036 = vmatprep.subr.mxu0 0.0
    %1037 = vmatpush1.msra.mxu0 0.0
    %1038 = vmatprep.subr.mxu0 0.0
    %1039 = vmatpush1.msra.mxu0 0.0
    %1040 = vmatprep.subr.mxu0 0.0
    %1041 = vmatpush1.msra.mxu0 0.0
    %1042 = vmatprep.subr.mxu0 0.0
    %1043 = vmatpush1.msra.mxu0 0.0
    %1044 = vmatprep.subr.mxu0 0.0
    %1045 = vmatpush1.msra.mxu0 0.0
    %1046 = vmatprep.subr.mxu0 0.0
    %1047 = vmatpush1.msra.mxu0 0.0
    %1048 = vmatprep.subr.mxu0 0.0
    %1049 = vmatpush1.msra.mxu0 0.0
    %1050 = vmatprep.subr.mxu0 0.0
    %1051 = vmatpush1.msra.mxu0 0.0
    %1052 = vmatprep.subr.mxu0 0.0
    %1053 = vmatpush1.msra.mxu0 0.0
    %1054 = vmatprep.subr.mxu0 0.0
    %1055 = vmatpush1.msra.mxu0 0.0
    %1056 = vmatprep.subr.mxu0 0.0
    %1057 = vmatpush1.msra.mxu0 0.0
    %1058 = vmatprep.subr.mxu0 0.0
    %1059 = vmatpush1.msra.mxu0 0.0
    %1060 = vmatprep.subr.mxu0 0.0
    %1061 = vmatpush1.msra.mxu0 0.0
    %1062 = vmatprep.subr.mxu0 0.0
    %1063 = vmatpush1.msra.mxu0 0.0
    %1064 = vmatprep.subr.mxu0 0.0
    %1065 = vmatpush1.msra.mxu0 0.0
    %1066 = vmatprep.subr.mxu0 0.0
    %1067 = vmatpush1.msra.mxu0 0.0
    %1068 = vmatprep.mubr.f32.mxu0 0.0
    %v1069 = vand.u32 %v994, 4294901760
    %v1070 = vsub.f32 %v994, %v1069
    %v1071 = vand.u32 %v1070, 4294901760
    %v1072 = vsub.f32 %v1070, %v1071
    %v1073 = vand.u32 %v1072, 4294901760
    %1074 = vmatmul.mubr.f32.gmra.mrb[0].mxu0 %v1073
    %v1075 = vpop.f32.mrb[0].mxu0
    %v1076 = vadd.f32 %v990, %v1075
    %v1077 = vpop.f32.mrb[0].mxu0
    %1078 = vdwg.mxu0
    %1079 = vmatprep.subr.mxu0 0.0
    %v1080 = vand.u32 %v977, 4294901760
    %v1081 = vsub.f32 %v977, %v1080
    %v1082 = vand.u32 %v1081, 4294901760
    %v1083 = vsub.f32 %v1081, %v1082
    %v1084 = vand.u32 %v1083, 4294901760
    %1085 = vmatpush1.msra.mxu0 %v1084
    %1086 = vmatprep.subr.mxu0 0.0
    %v1087 = vand.u32 %v978, 4294901760
    %v1088 = vsub.f32 %v978, %v1087
    %v1089 = vand.u32 %v1088, 4294901760
    %v1090 = vsub.f32 %v1088, %v1089
    %v1091 = vand.u32 %v1090, 4294901760
    %1092 = vmatpush1.msra.mxu0 %v1091
    %1093 = vmatprep.subr.mxu0 0.0
    %v1094 = vand.u32 %v979, 4294901760
    %v1095 = vsub.f32 %v979, %v1094
    %v1096 = vand.u32 %v1095, 4294901760
    %v1097 = vsub.f32 %v1095, %v1096
    %v1098 = vand.u32 %v1097, 4294901760
    %1099 = vmatpush1.msra.mxu0 %v1098
    %1100 = vmatprep.subr.mxu0 0.0
    %v1101 = vand.u32 %v980, 4294901760
    %v1102 = vsub.f32 %v980, %v1101
    %v1103 = vand.u32 %v1102, 4294901760
    %v1104 = vsub.f32 %v1102, %v1103
    %v1105 = vand.u32 %v1104, 4294901760
    %1106 = vmatpush1.msra.mxu0 %v1105
    %1107 = vmatprep.subr.mxu0 0.0
    %v1108 = vand.u32 %v981, 4294901760
    %v1109 = vsub.f32 %v981, %v1108
    %v1110 = vand.u32 %v1109, 4294901760
    %v1111 = vsub.f32 %v1109, %v1110
    %v1112 = vand.u32 %v1111, 4294901760
    %1113 = vmatpush1.msra.mxu0 %v1112
    %1114 = vmatprep.subr.mxu0 0.0
    %v1115 = vand.u32 %v982, 4294901760
    %v1116 = vsub.f32 %v982, %v1115
    %v1117 = vand.u32 %v1116, 4294901760
    %v1118 = vsub.f32 %v1116, %v1117
    %v1119 = vand.u32 %v1118, 4294901760
    %1120 = vmatpush1.msra.mxu0 %v1119
    %1121 = vmatprep.subr.mxu0 0.0
    %v1122 = vand.u32 %v983, 4294901760
    %v1123 = vsub.f32 %v983, %v1122
    %v1124 = vand.u32 %v1123, 4294901760
    %v1125 = vsub.f32 %v1123, %v1124
    %v1126 = vand.u32 %v1125, 4294901760
    %1127 = vmatpush1.msra.mxu0 %v1126
    %1128 = vmatprep.subr.mxu0 0.0
    %v1129 = vand.u32 %v984, 4294901760
    %v1130 = vsub.f32 %v984, %v1129
    %v1131 = vand.u32 %v1130, 4294901760
    %v1132 = vsub.f32 %v1130, %v1131
    %v1133 = vand.u32 %v1132, 4294901760
    %1134 = vmatpush1.msra.mxu0 %v1133
    %1135 = vmatprep.subr.mxu0 0.0
    %1136 = vmatpush1.msra.mxu0 0.0
    %1137 = vmatprep.subr.mxu0 0.0
    %1138 = vmatpush1.msra.mxu0 0.0
    %1139 = vmatprep.subr.mxu0 0.0
    %1140 = vmatpush1.msra.mxu0 0.0
    %1141 = vmatprep.subr.mxu0 0.0
    %1142 = vmatpush1.msra.mxu0 0.0
    %1143 = vmatprep.subr.mxu0 0.0
    %1144 = vmatpush1.msra.mxu0 0.0
    %1145 = vmatprep.subr.mxu0 0.0
    %1146 = vmatpush1.msra.mxu0 0.0
    %1147 = vmatprep.subr.mxu0 0.0
    %1148 = vmatpush1.msra.mxu0 0.0
    %1149 = vmatprep.subr.mxu0 0.0
    %1150 = vmatpush1.msra.mxu0 0.0
    %1151 = vmatprep.subr.mxu0 0.0
    %1152 = vmatpush1.msra.mxu0 0.0
    %1153 = vmatprep.subr.mxu0 0.0
    %1154 = vmatpush1.msra.mxu0 0.0
    %1155 = vmatprep.subr.mxu0 0.0
    %1156 = vmatpush1.msra.mxu0 0.0
    %1157 = vmatprep.subr.mxu0 0.0
    %1158 = vmatpush1.msra.mxu0 0.0
    %1159 = vmatprep.subr.mxu0 0.0
    %1160 = vmatpush1.msra.mxu0 0.0
    %1161 = vmatprep.subr.mxu0 0.0
    %1162 = vmatpush1.msra.mxu0 0.0
    %1163 = vmatprep.subr.mxu0 0.0
    %1164 = vmatpush1.msra.mxu0 0.0
    %1165 = vmatprep.subr.mxu0 0.0
    %1166 = vmatpush1.msra.mxu0 0.0
    %1167 = vmatprep.subr.mxu0 0.0
    %1168 = vmatpush1.msra.mxu0 0.0
    %1169 = vmatprep.subr.mxu0 0.0
    %1170 = vmatpush1.msra.mxu0 0.0
    %1171 = vmatprep.subr.mxu0 0.0
    %1172 = vmatpush1.msra.mxu0 0.0
    %1173 = vmatprep.subr.mxu0 0.0
    %1174 = vmatpush1.msra.mxu0 0.0
    %1175 = vmatprep.subr.mxu0 0.0
    %1176 = vmatpush1.msra.mxu0 0.0
    %1177 = vmatprep.subr.mxu0 0.0
    %1178 = vmatpush1.msra.mxu0 0.0
    %1179 = vmatprep.subr.mxu0 0.0
    %1180 = vmatpush1.msra.mxu0 0.0
    %1181 = vmatprep.subr.mxu0 0.0
    %1182 = vmatpush1.msra.mxu0 0.0
    %1183 = vmatprep.mubr.f32.mxu0 0.0
    %v1184 = vand.u32 %v994, 4294901760
    %1185 = vmatmul.mubr.f32.gmra.mrb[0].mxu0 %v1184
    %v1186 = vpop.f32.mrb[0].mxu0
    %v1187 = vadd.f32 %v1076, %v1186
    %v1188 = vpop.f32.mrb[0].mxu0
    %1189 = vdwg.mxu0
    %1190 = vmatprep.subr.mxu0 0.0
    %v1191 = vand.u32 %v977, 4294901760
    %v1192 = vsub.f32 %v977, %v1191
    %1193 = vmatpush1.msra.mxu0 %v1192
    %1194 = vmatprep.subr.mxu0 0.0
    %v1195 = vand.u32 %v978, 4294901760
    %v1196 = vsub.f32 %v978, %v1195
    %1197 = vmatpush1.msra.mxu0 %v1196
    %1198 = vmatprep.subr.mxu0 0.0
    %v1199 = vand.u32 %v979, 4294901760
    %v1200 = vsub.f32 %v979, %v1199
    %1201 = vmatpush1.msra.mxu0 %v1200
    %1202 = vmatprep.subr.mxu0 0.0
    %v1203 = vand.u32 %v980, 4294901760
    %v1204 = vsub.f32 %v980, %v1203
    %1205 = vmatpush1.msra.mxu0 %v1204
    %1206 = vmatprep.subr.mxu0 0.0
    %v1207 = vand.u32 %v981, 4294901760
    %v1208 = vsub.f32 %v981, %v1207
    %1209 = vmatpush1.msra.mxu0 %v1208
    %1210 = vmatprep.subr.mxu0 0.0
    %v1211 = vand.u32 %v982, 4294901760
    %v1212 = vsub.f32 %v982, %v1211
    %1213 = vmatpush1.msra.mxu0 %v1212
    %1214 = vmatprep.subr.mxu0 0.0
    %v1215 = vand.u32 %v983, 4294901760
    %v1216 = vsub.f32 %v983, %v1215
    %1217 = vmatpush1.msra.mxu0 %v1216
    %1218 = vmatprep.subr.mxu0 0.0
    %v1219 = vand.u32 %v984, 4294901760
    %v1220 = vsub.f32 %v984, %v1219
    %1221 = vmatpush1.msra.mxu0 %v1220
    %1222 = vmatprep.subr.mxu0 0.0
    %1223 = vmatpush1.msra.mxu0 0.0
    %1224 = vmatprep.subr.mxu0 0.0
    %1225 = vmatpush1.msra.mxu0 0.0
    %1226 = vmatprep.subr.mxu0 0.0
    %1227 = vmatpush1.msra.mxu0 0.0
    %1228 = vmatprep.subr.mxu0 0.0
    %1229 = vmatpush1.msra.mxu0 0.0
    %1230 = vmatprep.subr.mxu0 0.0
    %1231 = vmatpush1.msra.mxu0 0.0
    %1232 = vmatprep.subr.mxu0 0.0
    %1233 = vmatpush1.msra.mxu0 0.0
    %1234 = vmatprep.subr.mxu0 0.0
    %1235 = vmatpush1.msra.mxu0 0.0
    %1236 = vmatprep.subr.mxu0 0.0
    %1237 = vmatpush1.msra.mxu0 0.0
    %1238 = vmatprep.subr.mxu0 0.0
    %1239 = vmatpush1.msra.mxu0 0.0
    %1240 = vmatprep.subr.mxu0 0.0
    %1241 = vmatpush1.msra.mxu0 0.0
    %1242 = vmatprep.subr.mxu0 0.0
    %1243 = vmatpush1.msra.mxu0 0.0
    %1244 = vmatprep.subr.mxu0 0.0
    %1245 = vmatpush1.msra.mxu0 0.0
    %1246 = vmatprep.subr.mxu0 0.0
    %1247 = vmatpush1.msra.mxu0 0.0
    %1248 = vmatprep.subr.mxu0 0.0
    %1249 = vmatpush1.msra.mxu0 0.0
    %1250 = vmatprep.subr.mxu0 0.0
    %1251 = vmatpush1.msra.mxu0 0.0
    %1252 = vmatprep.subr.mxu0 0.0
    %1253 = vmatpush1.msra.mxu0 0.0
    %1254 = vmatprep.subr.mxu0 0.0
    %1255 = vmatpush1.msra.mxu0 0.0
    %1256 = vmatprep.subr.mxu0 0.0
    %1257 = vmatpush1.msra.mxu0 0.0
    %1258 = vmatprep.subr.mxu0 0.0
    %1259 = vmatpush1.msra.mxu0 0.0
    %1260 = vmatprep.subr.mxu0 0.0
    %1261 = vmatpush1.msra.mxu0 0.0
    %1262 = vmatprep.subr.mxu0 0.0
    %1263 = vmatpush1.msra.mxu0 0.0
    %1264 = vmatprep.subr.mxu0 0.0
    %1265 = vmatpush1.msra.mxu0 0.0
    %1266 = vmatprep.subr.mxu0 0.0
    %1267 = vmatpush1.msra.mxu0 0.0
    %1268 = vmatprep.subr.mxu0 0.0
    %1269 = vmatpush1.msra.mxu0 0.0
    %1270 = vmatprep.mubr.f32.mxu0 0.0
    %v1271 = vand.u32 %v994, 4294901760
    %v1272 = vsub.f32 %v994, %v1271
    %1273 = vmatmul.mubr.f32.gmra.mrb[0].mxu0 %v1272
    %v1274 = vpop.f32.mrb[0].mxu0
    %v1275 = vadd.f32 %v1187, %v1274
    %v1276 = vpop.f32.mrb[0].mxu0
    %1277 = vdwg.mxu0
    %1278 = vmatprep.subr.mxu0 0.0
    %v1279 = vand.u32 %v977, 4294901760
    %1280 = vmatpush1.msra.mxu0 %v1279
    %1281 = vmatprep.subr.mxu0 0.0
    %v1282 = vand.u32 %v978, 4294901760
    %1283 = vmatpush1.msra.mxu0 %v1282
    %1284 = vmatprep.subr.mxu0 0.0
    %v1285 = vand.u32 %v979, 4294901760
    %1286 = vmatpush1.msra.mxu0 %v1285
    %1287 = vmatprep.subr.mxu0 0.0
    %v1288 = vand.u32 %v980, 4294901760
    %1289 = vmatpush1.msra.mxu0 %v1288
    %1290 = vmatprep.subr.mxu0 0.0
    %v1291 = vand.u32 %v981, 4294901760
    %1292 = vmatpush1.msra.mxu0 %v1291
    %1293 = vmatprep.subr.mxu0 0.0
    %v1294 = vand.u32 %v982, 4294901760
    %1295 = vmatpush1.msra.mxu0 %v1294
    %1296 = vmatprep.subr.mxu0 0.0
    %v1297 = vand.u32 %v983, 4294901760
    %1298 = vmatpush1.msra.mxu0 %v1297
    %1299 = vmatprep.subr.mxu0 0.0
    %v1300 = vand.u32 %v984, 4294901760
    %1301 = vmatpush1.msra.mxu0 %v1300
    %1302 = vmatprep.subr.mxu0 0.0
    %1303 = vmatpush1.msra.mxu0 0.0
    %1304 = vmatprep.subr.mxu0 0.0
    %1305 = vmatpush1.msra.mxu0 0.0
    %1306 = vmatprep.subr.mxu0 0.0
    %1307 = vmatpush1.msra.mxu0 0.0
    %1308 = vmatprep.subr.mxu0 0.0
    %1309 = vmatpush1.msra.mxu0 0.0
    %1310 = vmatprep.subr.mxu0 0.0
    %1311 = vmatpush1.msra.mxu0 0.0
    %1312 = vmatprep.subr.mxu0 0.0
    %1313 = vmatpush1.msra.mxu0 0.0
    %1314 = vmatprep.subr.mxu0 0.0
    %1315 = vmatpush1.msra.mxu0 0.0
    %1316 = vmatprep.subr.mxu0 0.0
    %1317 = vmatpush1.msra.mxu0 0.0
    %1318 = vmatprep.subr.mxu0 0.0
    %1319 = vmatpush1.msra.mxu0 0.0
    %1320 = vmatprep.subr.mxu0 0.0
    %1321 = vmatpush1.msra.mxu0 0.0
    %1322 = vmatprep.subr.mxu0 0.0
    %1323 = vmatpush1.msra.mxu0 0.0
    %1324 = vmatprep.subr.mxu0 0.0
    %1325 = vmatpush1.msra.mxu0 0.0
    %1326 = vmatprep.subr.mxu0 0.0
    %1327 = vmatpush1.msra.mxu0 0.0
    %1328 = vmatprep.subr.mxu0 0.0
    %1329 = vmatpush1.msra.mxu0 0.0
    %1330 = vmatprep.subr.mxu0 0.0
    %1331 = vmatpush1.msra.mxu0 0.0
    %1332 = vmatprep.subr.mxu0 0.0
    %1333 = vmatpush1.msra.mxu0 0.0
    %1334 = vmatprep.subr.mxu0 0.0
    %1335 = vmatpush1.msra.mxu0 0.0
    %1336 = vmatprep.subr.mxu0 0.0
    %1337 = vmatpush1.msra.mxu0 0.0
    %1338 = vmatprep.subr.mxu0 0.0
    %1339 = vmatpush1.msra.mxu0 0.0
    %1340 = vmatprep.subr.mxu0 0.0
    %1341 = vmatpush1.msra.mxu0 0.0
    %1342 = vmatprep.subr.mxu0 0.0
    %1343 = vmatpush1.msra.mxu0 0.0
    %1344 = vmatprep.subr.mxu0 0.0
    %1345 = vmatpush1.msra.mxu0 0.0
    %1346 = vmatprep.subr.mxu0 0.0
    %1347 = vmatpush1.msra.mxu0 0.0
    %1348 = vmatprep.subr.mxu0 0.0
    %1349 = vmatpush1.msra.mxu0 0.0
    %1350 = vmatprep.mubr.f32.mxu0 0.0
    %v1351 = vand.u32 %v994, 4294901760
    %v1352 = vsub.f32 %v994, %v1351
    %v1353 = vand.u32 %v1352, 4294901760
    %1354 = vmatmul.mubr.f32.gmra.mrb[0].mxu0 %v1353
    %v1355 = vpop.f32.mrb[0].mxu0
    %v1356 = vadd.f32 %v1275, %v1355
    %v1357 = vpop.f32.mrb[0].mxu0
    %1358 = vdwg.mxu0
    %1359 = vmatprep.subr.mxu0 0.0
    %v1360 = vand.u32 %v977, 4294901760
    %v1361 = vsub.f32 %v977, %v1360
    %v1362 = vand.u32 %v1361, 4294901760
    %1363 = vmatpush1.msra.mxu0 %v1362
    %1364 = vmatprep.subr.mxu0 0.0
    %v1365 = vand.u32 %v978, 4294901760
    %v1366 = vsub.f32 %v978, %v1365
    %v1367 = vand.u32 %v1366, 4294901760
    %1368 = vmatpush1.msra.mxu0 %v1367
    %1369 = vmatprep.subr.mxu0 0.0
    %v1370 = vand.u32 %v979, 4294901760
    %v1371 = vsub.f32 %v979, %v1370
    %v1372 = vand.u32 %v1371, 4294901760
    %1373 = vmatpush1.msra.mxu0 %v1372
    %1374 = vmatprep.subr.mxu0 0.0
    %v1375 = vand.u32 %v980, 4294901760
    %v1376 = vsub.f32 %v980, %v1375
    %v1377 = vand.u32 %v1376, 4294901760
    %1378 = vmatpush1.msra.mxu0 %v1377
    %1379 = vmatprep.subr.mxu0 0.0
    %v1380 = vand.u32 %v981, 4294901760
    %v1381 = vsub.f32 %v981, %v1380
    %v1382 = vand.u32 %v1381, 4294901760
    %1383 = vmatpush1.msra.mxu0 %v1382
    %1384 = vmatprep.subr.mxu0 0.0
    %v1385 = vand.u32 %v982, 4294901760
    %v1386 = vsub.f32 %v982, %v1385
    %v1387 = vand.u32 %v1386, 4294901760
    %1388 = vmatpush1.msra.mxu0 %v1387
    %1389 = vmatprep.subr.mxu0 0.0
    %v1390 = vand.u32 %v983, 4294901760
    %v1391 = vsub.f32 %v983, %v1390
    %v1392 = vand.u32 %v1391, 4294901760
    %1393 = vmatpush1.msra.mxu0 %v1392
    %1394 = vmatprep.subr.mxu0 0.0
    %v1395 = vand.u32 %v984, 4294901760
    %v1396 = vsub.f32 %v984, %v1395
    %v1397 = vand.u32 %v1396, 4294901760
    %1398 = vmatpush1.msra.mxu0 %v1397
    %1399 = vmatprep.subr.mxu0 0.0
    %1400 = vmatpush1.msra.mxu0 0.0
    %1401 = vmatprep.subr.mxu0 0.0
    %1402 = vmatpush1.msra.mxu0 0.0
    %1403 = vmatprep.subr.mxu0 0.0
    %1404 = vmatpush1.msra.mxu0 0.0
    %1405 = vmatprep.subr.mxu0 0.0
    %1406 = vmatpush1.msra.mxu0 0.0
    %1407 = vmatprep.subr.mxu0 0.0
    %1408 = vmatpush1.msra.mxu0 0.0
    %1409 = vmatprep.subr.mxu0 0.0
    %1410 = vmatpush1.msra.mxu0 0.0
    %1411 = vmatprep.subr.mxu0 0.0
    %1412 = vmatpush1.msra.mxu0 0.0
    %1413 = vmatprep.subr.mxu0 0.0
    %1414 = vmatpush1.msra.mxu0 0.0
    %1415 = vmatprep.subr.mxu0 0.0
    %1416 = vmatpush1.msra.mxu0 0.0
    %1417 = vmatprep.subr.mxu0 0.0
    %1418 = vmatpush1.msra.mxu0 0.0
    %1419 = vmatprep.subr.mxu0 0.0
    %1420 = vmatpush1.msra.mxu0 0.0
    %1421 = vmatprep.subr.mxu0 0.0
    %1422 = vmatpush1.msra.mxu0 0.0
    %1423 = vmatprep.subr.mxu0 0.0
    %1424 = vmatpush1.msra.mxu0 0.0
    %1425 = vmatprep.subr.mxu0 0.0
    %1426 = vmatpush1.msra.mxu0 0.0
    %1427 = vmatprep.subr.mxu0 0.0
    %1428 = vmatpush1.msra.mxu0 0.0
    %1429 = vmatprep.subr.mxu0 0.0
    %1430 = vmatpush1.msra.mxu0 0.0
    %1431 = vmatprep.subr.mxu0 0.0
    %1432 = vmatpush1.msra.mxu0 0.0
    %1433 = vmatprep.subr.mxu0 0.0
    %1434 = vmatpush1.msra.mxu0 0.0
    %1435 = vmatprep.subr.mxu0 0.0
    %1436 = vmatpush1.msra.mxu0 0.0
    %1437 = vmatprep.subr.mxu0 0.0
    %1438 = vmatpush1.msra.mxu0 0.0
    %1439 = vmatprep.subr.mxu0 0.0
    %1440 = vmatpush1.msra.mxu0 0.0
    %1441 = vmatprep.subr.mxu0 0.0
    %1442 = vmatpush1.msra.mxu0 0.0
    %1443 = vmatprep.subr.mxu0 0.0
    %1444 = vmatpush1.msra.mxu0 0.0
    %1445 = vmatprep.subr.mxu0 0.0
    %1446 = vmatpush1.msra.mxu0 0.0
    %1447 = vmatprep.mubr.f32.mxu0 0.0
    %v1448 = vand.u32 %v994, 4294901760
    %1449 = vmatmul.mubr.f32.gmra.mrb[0].mxu0 %v1448
    %v1450 = vpop.f32.mrb[0].mxu0
    %v1451 = vadd.f32 %v1356, %v1450
    %v1452 = vpop.f32.mrb[0].mxu0
    %1453 = vdwg.mxu0
    %1454 = vmatprep.subr.mxu0 0.0
    %v1455 = vand.u32 %v977, 4294901760
    %1456 = vmatpush1.msra.mxu0 %v1455
    %1457 = vmatprep.subr.mxu0 0.0
    %v1458 = vand.u32 %v978, 4294901760
    %1459 = vmatpush1.msra.mxu0 %v1458
    %1460 = vmatprep.subr.mxu0 0.0
    %v1461 = vand.u32 %v979, 4294901760
    %1462 = vmatpush1.msra.mxu0 %v1461
    %1463 = vmatprep.subr.mxu0 0.0
    %v1464 = vand.u32 %v980, 4294901760
    %1465 = vmatpush1.msra.mxu0 %v1464
    %1466 = vmatprep.subr.mxu0 0.0
    %v1467 = vand.u32 %v981, 4294901760
    %1468 = vmatpush1.msra.mxu0 %v1467
    %1469 = vmatprep.subr.mxu0 0.0
    %v1470 = vand.u32 %v982, 4294901760
    %1471 = vmatpush1.msra.mxu0 %v1470
    %1472 = vmatprep.subr.mxu0 0.0
    %v1473 = vand.u32 %v983, 4294901760
    %1474 = vmatpush1.msra.mxu0 %v1473
    %1475 = vmatprep.subr.mxu0 0.0
    %v1476 = vand.u32 %v984, 4294901760
    %1477 = vmatpush1.msra.mxu0 %v1476
    %1478 = vmatprep.subr.mxu0 0.0
    %1479 = vmatpush1.msra.mxu0 0.0
    %1480 = vmatprep.subr.mxu0 0.0
    %1481 = vmatpush1.msra.mxu0 0.0
    %1482 = vmatprep.subr.mxu0 0.0
    %1483 = vmatpush1.msra.mxu0 0.0
    %1484 = vmatprep.subr.mxu0 0.0
    %1485 = vmatpush1.msra.mxu0 0.0
    %1486 = vmatprep.subr.mxu0 0.0
    %1487 = vmatpush1.msra.mxu0 0.0
    %1488 = vmatprep.subr.mxu0 0.0
    %1489 = vmatpush1.msra.mxu0 0.0
    %1490 = vmatprep.subr.mxu0 0.0
    %1491 = vmatpush1.msra.mxu0 0.0
    %1492 = vmatprep.subr.mxu0 0.0
    %1493 = vmatpush1.msra.mxu0 0.0
    %1494 = vmatprep.subr.mxu0 0.0
    %1495 = vmatpush1.msra.mxu0 0.0
    %1496 = vmatprep.subr.mxu0 0.0
    %1497 = vmatpush1.msra.mxu0 0.0
    %1498 = vmatprep.subr.mxu0 0.0
    %1499 = vmatpush1.msra.mxu0 0.0
    %1500 = vmatprep.subr.mxu0 0.0
    %1501 = vmatpush1.msra.mxu0 0.0
    %1502 = vmatprep.subr.mxu0 0.0
    %1503 = vmatpush1.msra.mxu0 0.0
    %1504 = vmatprep.subr.mxu0 0.0
    %1505 = vmatpush1.msra.mxu0 0.0
    %1506 = vmatprep.subr.mxu0 0.0
    %1507 = vmatpush1.msra.mxu0 0.0
    %1508 = vmatprep.subr.mxu0 0.0
    %1509 = vmatpush1.msra.mxu0 0.0
    %1510 = vmatprep.subr.mxu0 0.0
    %1511 = vmatpush1.msra.mxu0 0.0
    %1512 = vmatprep.subr.mxu0 0.0
    %1513 = vmatpush1.msra.mxu0 0.0
    %1514 = vmatprep.subr.mxu0 0.0
    %1515 = vmatpush1.msra.mxu0 0.0
    %1516 = vmatprep.subr.mxu0 0.0
    %1517 = vmatpush1.msra.mxu0 0.0
    %1518 = vmatprep.subr.mxu0 0.0
    %1519 = vmatpush1.msra.mxu0 0.0
    %1520 = vmatprep.subr.mxu0 0.0
    %1521 = vmatpush1.msra.mxu0 0.0
    %1522 = vmatprep.subr.mxu0 0.0
    %1523 = vmatpush1.msra.mxu0 0.0
    %1524 = vmatprep.subr.mxu0 0.0
    %1525 = vmatpush1.msra.mxu0 0.0
    %1526 = vmatprep.mubr.f32.mxu0 0.0
    %v1527 = vand.u32 %v994, 4294901760
    %1528 = vmatmul.mubr.f32.gmra.mrb[0].mxu0 %v1527
    %v1529 = vpop.f32.mrb[0].mxu0
    %v1530 = vadd.f32 %v1451, %v1529
    %v1531 = vpop.f32.mrb[0].mxu0
    %1532 = vdwg.mxu0
    %1533 = vst [vmem:[#allocation10] sm:$0xff] %v1530
    // Predicated region
    $region42: #{tpu_custom_call.1} parent=1 // pred_check
      _
    $region43: #{tpu_custom_call.1} parent=1 // pred_check_branch
      %1535 = sbr.rel (0) target = $region45
    $region44: #{tpu_custom_call.1} parent=1 // pred_region
      %s1537 = ssub.s32 128, 128
      %1538 = vsyncadd [#allocation4], %s1537
      %s1540 = sshll.u32 [#allocation10], 4
      %s1541 = int_to_ptr.vmem [resolvable:$true] %s1540
      %1543 = dma.vmem_to_hbm [thread:$0]  %s1541, 128, %s6, [#allocation4]
    $region45: #{tpu_custom_call.1} parent=1 // pred_fallthru
      _
    // Predicated region
    $region46: #{tpu_custom_call.1} parent=1 // pred_check
      _
    $region47: #{tpu_custom_call.1} parent=1 // pred_check_branch
      %1545 = sbr.rel (0) target = $region49
    $region48: #{tpu_custom_call.1} parent=1 // pred_region
      %1546 = dma.done [#allocation4], 128
    $region49: #{tpu_custom_call.1} parent=1 // pred_fallthru
      _
    %1547 = vsyncpa [#allocation3], 1
    %1548 = vsyncpa [#allocation6], 1
    %1549 = vsyncpa [#allocation9], 1
    %1550 = vsyncpa [#allocation4], 1

</llo_original>
